<compile_context>
chip_gen: v7x
topology: tpu7x:2x2x1
jax: 0.10.0
libtpu: 0.0.40
codegen_flags: <defaults>
</compile_context>

<pallas_src>
import functools

import jax
import jax.numpy as jnp
from jax.experimental import pallas as pl
from jax.experimental.pallas import tpu as pltpu

EPS = 1e-5  # RMSNorm epsilon (module default norm_epsilon=1e-5)


# ----------------------------------------------------------------------------
# Fused U-Net kernel.  Activations live entirely in registers/VMEM; the only
# HBM traffic is the packed input block, the packed output block and the
# (bf16) weights.  Sequence positions are carried as "mod-4 streams" packed
# along lanes, so pooling / conv-transpose interleaving never needs any
# row reordering.
# ----------------------------------------------------------------------------
def _unet_kernel(
    x_ref,                                                 # (RB, 4*C0)
    d1w1, d1b1, d1g, d1w2, d1b2,                           # down1
    d2w1, d2b1, d2g, d2w2, d2b2,                           # down2
    u2wt01, u2bt2, u2w1a, u2w1b, u2b1, u2g, u2w2, u2b2,    # up2
    u1wt01, u1bt2, u1w1a, u1w1b, u1b1, u1g, u1w2, u1b2,    # up1
    o_ref,                                                 # (RB, 4*C0)
    *,
    c0: int,
):
    f32, bf16 = jnp.float32, jnp.bfloat16

    def mm(a, w_ref):
        # bf16 operands -> full-rate MXU on v6e/v7x; f32 accumulation.
        return jnp.dot(a.astype(bf16), w_ref[...], preferred_element_type=f32)

    def norm_silu_linear(h, g_ref, w2_ref, b2_ref):
        # RMSNorm -> SiLU -> Linear (elementwise kept in f32: VPU/EUP path).
        hn = h * jax.lax.rsqrt(jnp.mean(h * h, axis=-1, keepdims=True) + EPS)
        hn = hn * g_ref[...]
        hs = hn * jax.nn.sigmoid(hn)
        return mm(hs, w2_ref) + b2_ref[...]

    def down_mlp(xp, w1, b1, g, w2, b2):
        return norm_silu_linear(mm(xp, w1) + b1[...], g, w2, b2)

    x = x_ref[...].astype(f32)                             # (RB, 4*C0)
    r = x.shape[0]
    # Sequence-position streams mod 4 (per packed row): x1_k[s] == x1[4s + k].
    x1 = [x[:, k * c0:(k + 1) * c0] for k in range(4)]     # 4 x (RB, C0)

    # ---- down1: MaxPool1d(2) -> Linear -> RMSNorm -> SiLU -> Linear --------
    p1_e = jnp.maximum(x1[0], x1[1])                       # pooled even positions
    p1_o = jnp.maximum(x1[2], x1[3])                       # pooled odd positions
    p1 = jnp.concatenate([p1_e, p1_o], axis=0)             # rows: [even ; odd]
    x2 = down_mlp(p1, d1w1, d1b1, d1g, d1w2, d1b2)         # (2*RB, 2*C0)

    # ---- down2 --------------------------------------------------------------
    p2 = jnp.maximum(x2[:r], x2[r:])                       # (RB, 2*C0)
    x3 = down_mlp(p2, d2w1, d2b1, d2g, d2w2, d2b2)         # (RB, 4*C0)

    # ---- up2: ConvTranspose1d(k=2, s=2) -> cat(skip) -> MLP -----------------
    up = mm(x3, u2wt01) + u2bt2[...]                       # (RB, 8*C0) = [tap0|tap1]
    u_stack = jnp.concatenate([up[:, :4 * c0], up[:, 4 * c0:]], axis=0)  # (2*RB, 4*C0)
    h = mm(u_stack, u2w1a) + mm(x2, u2w1b) + u2b1[...]
    u2 = norm_silu_linear(h, u2g, u2w2, u2b2)              # (2*RB, 2*C0): [even ; odd]

    # ---- up1 -----------------------------------------------------------------
    up = mm(u2, u1wt01) + u1bt2[...]                       # (2*RB, 4*C0) = [tap0|tap1]
    # rows [:r] are u2 even positions (2s), rows [r:] are odd positions (2s+1);
    # tap k lands at sequence position 2*pos + k  =>  mod-4 output streams:
    o4 = [up[:r, :2 * c0],     # positions 4s
          up[:r, 2 * c0:],     # positions 4s + 1
          up[r:, :2 * c0],     # positions 4s + 2
          up[r:, 2 * c0:]]     # positions 4s + 3
    o_stack = jnp.concatenate(o4, axis=0)                  # (4*RB, 2*C0)
    skip_stack = jnp.concatenate(x1, axis=0)               # (4*RB, C0)
    h = mm(o_stack, u1w1a) + mm(skip_stack, u1w1b) + u1b1[...]
    y = norm_silu_linear(h, u1g, u1w2, u1b2)               # (4*RB, C0)

    o_ref[...] = jnp.concatenate(
        [y[k * r:(k + 1) * r] for k in range(4)], axis=-1).astype(o_ref.dtype)


# ----------------------------------------------------------------------------
# Wrapper
# ----------------------------------------------------------------------------
def _weight_operands(params):
    """Pre-cast matmul weights to bf16, keep biases / gammas in f32.
    Conv-transpose taps are lane-concatenated so each up block does one matmul."""
    bf, f32 = jnp.bfloat16, jnp.float32

    def down_ops(p):
        return [p["w1"].astype(bf), p["b1"].astype(f32), p["g"].astype(f32),
                p["w2"].astype(bf), p["b2"].astype(f32)]

    def up_ops(p):
        wt01 = jnp.concatenate([p["wt0"], p["wt1"]], axis=1).astype(bf)
        bt2 = jnp.concatenate([p["bt"], p["bt"]], axis=1).astype(f32)
        return [wt01, bt2, p["w1a"].astype(bf), p["w1b"].astype(bf),
                p["b1"].astype(f32), p["g"].astype(f32),
                p["w2"].astype(bf), p["b2"].astype(f32)]

    return (down_ops(params["down1"]) + down_ops(params["down2"])
            + up_ops(params["up2"]) + up_ops(params["up1"]))


def _pick_batch_tile(B, rows_per_batch):
    """Batch tile so a block's packed-row count is a sublane multiple of 8
    (or falls back to the full batch, which is always legal)."""
    tb = B
    for cand in range(1, B + 1):
        if B % cand:
            continue
        if (cand * rows_per_batch) % 8 == 0:
            tb = cand
            if cand * rows_per_batch >= 64:     # ~256 full-resolution rows / block
                break
    return tb


def _cost_estimate(B, L, C0, weight_bytes):
    M1, M2, M4 = B * L, B * L // 2, B * L // 4
    fl = 0
    fl += 2 * M2 * (C0 * 2 * C0 + 2 * C0 * 2 * C0)                        # down1
    fl += 2 * M4 * (2 * C0 * 4 * C0 + 4 * C0 * 4 * C0)                    # down2
    fl += 2 * M4 * (4 * C0 * 8 * C0)                                      # up2 convT
    fl += 2 * M2 * (4 * C0 * 2 * C0 + 2 * C0 * 2 * C0 + 2 * C0 * 2 * C0)  # up2 mlp
    fl += 2 * M2 * (2 * C0 * 4 * C0)                                      # up1 convT
    fl += 2 * M1 * (2 * C0 * C0 + C0 * C0 + C0 * C0)                      # up1 mlp
    trans = 2 * (M2 * 2 * C0 + M4 * 4 * C0 + M2 * 2 * C0 + M1 * C0)       # sigmoid+rsqrt
    io_bytes = 2 * (M4 * 4 * C0) * 4 + weight_bytes
    return pl.CostEstimate(flops=int(fl), transcendentals=int(trans),
                           bytes_accessed=int(io_bytes))


def diff_motion_unet(params, x, embed=None):
    # TODO(synk): BaseMLP / MotionMamba sources are not provided -> identity
    # (embed unused); only the Down/Up U-Net path is implemented.
    del embed
    B, L, C0 = x.shape
    assert L % 4 == 0, "sequence length must be a multiple of 4"
    M4 = B * L // 4
    x_pack = x.reshape(M4, 4 * C0)                 # 4 seq positions per row (lane-dense)

    rows_per_batch = L // 4
    tb = _pick_batch_tile(B, rows_per_batch)
    rb = tb * rows_per_batch
    grid = (B // tb,)

    w_ops = _weight_operands(params)
    weight_bytes = int(sum(op.size * op.dtype.itemsize for op in w_ops))

    act_spec = pl.BlockSpec((rb, 4 * C0), lambda b: (b, 0))
    in_specs = [act_spec] + [pl.BlockSpec(op.shape, lambda b: (0, 0)) for op in w_ops]

    out = pl.pallas_call(
        functools.partial(_unet_kernel, c0=C0),
        grid=grid,
        in_specs=in_specs,
        out_specs=act_spec,
        out_shape=jax.ShapeDtypeStruct((M4, 4 * C0), x.dtype),
        compiler_params=pltpu.CompilerParams(dimension_semantics=("parallel",)),
        cost_estimate=_cost_estimate(B, L, C0, weight_bytes),
    )(x_pack, *w_ops)
    return out.reshape(B, L, C0)


# ----------------------------------------------------------------------------
# Parameters (deterministic synthetic init).
# NOTE: weights stored as (in, out); when loading real PyTorch weights,
# nn.Linear weights must be transposed and ConvTranspose1d weight (Cin,Cout,2)
# split into wt0 = W[:, :, 0], wt1 = W[:, :, 1]; the up-block Linear1 weight
# splits as w1a = W1[:input_dim], w1b = W1[input_dim:] (cat([up, skip]) order).
# ----------------------------------------------------------------------------
def _linear(key, cin, cout):
    kw, kb = jax.random.split(key)
    w = jax.random.normal(kw, (cin, cout), jnp.float32) * (1.0 / float(cin) ** 0.5)
    b = 0.01 * jax.random.normal(kb, (1, cout), jnp.float32)
    return w, b


def init_params(key, latent):
    def down_params(k, cin, cout):
        k1, k2 = jax.random.split(k)
        w1, b1 = _linear(k1, cin, cout)
        w2, b2 = _linear(k2, cout, cout)
        return dict(w1=w1, b1=b1, g=jnp.ones((1, cout), jnp.float32), w2=w2, b2=b2)

    def up_params(k, cin, cskip, cout):
        k0, k1, k2, k3 = jax.random.split(k, 4)
        wt0, bt = _linear(k0, cin, cin)            # ConvTranspose1d weight[:, :, 0]
        wt1, _ = _linear(k3, cin, cin)             # ConvTranspose1d weight[:, :, 1]
        w1, b1 = _linear(k1, cin + cskip, cout)
        w2, b2 = _linear(k2, cout, cout)
        return dict(wt0=wt0, wt1=wt1, bt=bt,
                    w1a=w1[:cin], w1b=w1[cin:], b1=b1,
                    g=jnp.ones((1, cout), jnp.float32), w2=w2, b2=b2)

    k1, k2, k3, k4 = jax.random.split(key, 4)
    return dict(
        down1=down_params(k1, latent, 2 * latent),
        down2=down_params(k2, 2 * latent, 4 * latent),
        up2=up_params(k3, 4 * latent, 2 * latent, 2 * latent),
        up1=up_params(k4, 2 * latent, latent, latent),
    )


# ----------------------------------------------------------------------------
# Pure-JAX reference (per-batch (B, L, C) semantics, no stream packing).
# matmul_dtype=bf16 reproduces the kernel's MXU quantization exactly.
# ----------------------------------------------------------------------------
def _ref_forward(params, x, matmul_dtype=jnp.float32):
    def hdot(a, b):
        return jnp.dot(a.astype(matmul_dtype), b.astype(matmul_dtype),
                       preferred_element_type=jnp.float32)

    def mlp_tail(h, p):
        hn = h * jax.lax.rsqrt(jnp.mean(h * h, axis=-1, keepdims=True) + EPS) * p["g"]
        hs = hn * jax.nn.sigmoid(hn)
        return hdot(hs, p["w2"]) + p["b2"]

    def down(xv, p):
        xp = jnp.maximum(xv[:, 0::2, :], xv[:, 1::2, :])          # MaxPool1d(2)
        h = hdot(xp, p["w1"]) + p["b1"]
        return mlp_tail(h, p)

    def up(xv, skip, p):
        B, Lh, C = xv.shape
        e = hdot(xv, p["wt0"]) + p["bt"]
        o = hdot(xv, p["wt1"]) + p["bt"]
        u = jnp.stack([e, o], axis=2).reshape(B, 2 * Lh, C)       # ConvTranspose1d(2,2)
        h = hdot(u, p["w1a"]) + hdot(skip, p["w1b"]) + p["b1"]
        return mlp_tail(h, p)

    x1 = x
    x2 = down(x1, params["down1"])
    x3 = down(x2, params["down2"])
    u2 = up(x3, x2, params["up2"])
    return up(u2, x1, params["up1"])


if __name__ == "__main__":
    key = jax.random.PRNGKey(0)
    B, seq, latent = 2, 16, 32
    kx, ke, kp = jax.random.split(key, 3)
    x = jax.random.normal(kx, (B, seq, latent), jnp.float32)
    embed = jax.random.normal(ke, (B, latent), jnp.float32)   # unused (identity TODO)
    params = init_params(kp, latent)

    fwd = jax.jit(diff_motion_unet)
    out = jax.block_until_ready(fwd(params, x, embed))

    assert out.shape == (B, seq, latent), out.shape
    assert bool(jnp.all(jnp.isfinite(out)))

    # Tight check vs a reference that quantizes matmul operands identically
    # (bf16 operands, f32 MXU accumulation): residual is rounding-order only.
    ref_matched = _ref_forward(params, x, matmul_dtype=jnp.bfloat16)
    err_matched = float(jnp.max(jnp.abs(out - ref_matched)))
    assert err_matched < 5e-3, f"bf16-matched reference mismatch: {err_matched}"

    # Documented error band vs a full-f32 reference: bf16 matmul-operand
    # quantization through ~10 chained matmuls gives ~1e-2 abs error here.
    ref_f32 = _ref_forward(params, x)
    err_f32 = float(jnp.max(jnp.abs(out - ref_f32)))
    assert err_f32 < 0.25, f"bf16 error band exceeded vs f32 reference: {err_f32}"

    print("KERNEL_OK")
</pallas_src>

<mosaic_0001>
module attributes {stable_mosaic.version = 11 : i64} {
  func.func @_unet_kernel(%arg0: i32, %arg1: memref<8x128xf32, #tpu.memory_space<vmem>>, %arg2: memref<32x64xbf16, #tpu.memory_space<vmem>>, %arg3: memref<1x64xf32, #tpu.memory_space<vmem>>, %arg4: memref<1x64xf32, #tpu.memory_space<vmem>>, %arg5: memref<64x64xbf16, #tpu.memory_space<vmem>>, %arg6: memref<1x64xf32, #tpu.memory_space<vmem>>, %arg7: memref<64x128xbf16, #tpu.memory_space<vmem>>, %arg8: memref<1x128xf32, #tpu.memory_space<vmem>>, %arg9: memref<1x128xf32, #tpu.memory_space<vmem>>, %arg10: memref<128x128xbf16, #tpu.memory_space<vmem>>, %arg11: memref<1x128xf32, #tpu.memory_space<vmem>>, %arg12: memref<128x256xbf16, #tpu.memory_space<vmem>>, %arg13: memref<1x256xf32, #tpu.memory_space<vmem>>, %arg14: memref<128x64xbf16, #tpu.memory_space<vmem>>, %arg15: memref<64x64xbf16, #tpu.memory_space<vmem>>, %arg16: memref<1x64xf32, #tpu.memory_space<vmem>>, %arg17: memref<1x64xf32, #tpu.memory_space<vmem>>, %arg18: memref<64x64xbf16, #tpu.memory_space<vmem>>, %arg19: memref<1x64xf32, #tpu.memory_space<vmem>>, %arg20: memref<64x128xbf16, #tpu.memory_space<vmem>>, %arg21: memref<1x128xf32, #tpu.memory_space<vmem>>, %arg22: memref<64x32xbf16, #tpu.memory_space<vmem>>, %arg23: memref<32x32xbf16, #tpu.memory_space<vmem>>, %arg24: memref<1x32xf32, #tpu.memory_space<vmem>>, %arg25: memref<1x32xf32, #tpu.memory_space<vmem>>, %arg26: memref<32x32xbf16, #tpu.memory_space<vmem>>, %arg27: memref<1x32xf32, #tpu.memory_space<vmem>>, %arg28: memref<8x128xf32, #tpu.memory_space<vmem>>) attributes {dimension_semantics = [#tpu.dimension_semantics<parallel>], iteration_bounds = array<i64: 1>, scalar_prefetch = 0 : i64, scratch_operands = 0 : i64, tpu.core_type = #tpu.core_type<tc>, window_params = [{transform_indices = @transform_0, window_bounds = array<i64: 8, 128>}, {pipeline_mode = #tpu.pipeline_mode<synchronous>, transform_indices = @transform_1, window_bounds = array<i64: 32, 64>}, {pipeline_mode = #tpu.pipeline_mode<synchronous>, transform_indices = @transform_2, window_bounds = array<i64: 1, 64>}, {pipeline_mode = #tpu.pipeline_mode<synchronous>, transform_indices = @transform_3, window_bounds = array<i64: 1, 64>}, {pipeline_mode = #tpu.pipeline_mode<synchronous>, transform_indices = @transform_4, window_bounds = array<i64: 64, 64>}, {pipeline_mode = #tpu.pipeline_mode<synchronous>, transform_indices = @transform_5, window_bounds = array<i64: 1, 64>}, {pipeline_mode = #tpu.pipeline_mode<synchronous>, transform_indices = @transform_6, window_bounds = array<i64: 64, 128>}, {pipeline_mode = #tpu.pipeline_mode<synchronous>, transform_indices = @transform_7, window_bounds = array<i64: 1, 128>}, {pipeline_mode = #tpu.pipeline_mode<synchronous>, transform_indices = @transform_8, window_bounds = array<i64: 1, 128>}, {pipeline_mode = #tpu.pipeline_mode<synchronous>, transform_indices = @transform_9, window_bounds = array<i64: 128, 128>}, {pipeline_mode = #tpu.pipeline_mode<synchronous>, transform_indices = @transform_10, window_bounds = array<i64: 1, 128>}, {pipeline_mode = #tpu.pipeline_mode<synchronous>, transform_indices = @transform_11, window_bounds = array<i64: 128, 256>}, {pipeline_mode = #tpu.pipeline_mode<synchronous>, transform_indices = @transform_12, window_bounds = array<i64: 1, 256>}, {pipeline_mode = #tpu.pipeline_mode<synchronous>, transform_indices = @transform_13, window_bounds = array<i64: 128, 64>}, {pipeline_mode = #tpu.pipeline_mode<synchronous>, transform_indices = @transform_14, window_bounds = array<i64: 64, 64>}, {pipeline_mode = #tpu.pipeline_mode<synchronous>, transform_indices = @transform_15, window_bounds = array<i64: 1, 64>}, {pipeline_mode = #tpu.pipeline_mode<synchronous>, transform_indices = @transform_16, window_bounds = array<i64: 1, 64>}, {pipeline_mode = #tpu.pipeline_mode<synchronous>, transform_indices = @transform_17, window_bounds = array<i64: 64, 64>}, {pipeline_mode = #tpu.pipeline_mode<synchronous>, transform_indices = @transform_18, window_bounds = array<i64: 1, 64>}, {pipeline_mode = #tpu.pipeline_mode<synchronous>, transform_indices = @transform_19, window_bounds = array<i64: 64, 128>}, {pipeline_mode = #tpu.pipeline_mode<synchronous>, transform_indices = @transform_20, window_bounds = array<i64: 1, 128>}, {pipeline_mode = #tpu.pipeline_mode<synchronous>, transform_indices = @transform_21, window_bounds = array<i64: 64, 32>}, {pipeline_mode = #tpu.pipeline_mode<synchronous>, transform_indices = @transform_22, window_bounds = array<i64: 32, 32>}, {pipeline_mode = #tpu.pipeline_mode<synchronous>, transform_indices = @transform_23, window_bounds = array<i64: 1, 32>}, {pipeline_mode = #tpu.pipeline_mode<synchronous>, transform_indices = @transform_24, window_bounds = array<i64: 1, 32>}, {pipeline_mode = #tpu.pipeline_mode<synchronous>, transform_indices = @transform_25, window_bounds = array<i64: 32, 32>}, {pipeline_mode = #tpu.pipeline_mode<synchronous>, transform_indices = @transform_26, window_bounds = array<i64: 1, 32>}, {transform_indices = @transform_27, window_bounds = array<i64: 8, 128>}]} {
    %c0 = arith.constant 0 : index
    %c0_0 = arith.constant 0 : index
    %0 = vector.load %arg1[%c0, %c0_0] : memref<8x128xf32, #tpu.memory_space<vmem>>, vector<8x128xf32>
    %1 = vector.extract_strided_slice %0 {offsets = [0, 0], sizes = [8, 32], strides = [1, 1]} : vector<8x128xf32> to vector<8x32xf32>
    %2 = vector.extract_strided_slice %0 {offsets = [0, 32], sizes = [8, 32], strides = [1, 1]} : vector<8x128xf32> to vector<8x32xf32>
    %3 = vector.extract_strided_slice %0 {offsets = [0, 64], sizes = [8, 32], strides = [1, 1]} : vector<8x128xf32> to vector<8x32xf32>
    %4 = vector.extract_strided_slice %0 {offsets = [0, 96], sizes = [8, 32], strides = [1, 1]} : vector<8x128xf32> to vector<8x32xf32>
    %5 = arith.maximumf %1, %2 : vector<8x32xf32>
    %6 = arith.maximumf %3, %4 : vector<8x32xf32>
    %7 = tpu.concatenate %5, %6 in 0 : vector<8x32xf32>, vector<8x32xf32> -> vector<16x32xf32>
    %8 = arith.truncf %7 : vector<16x32xf32> to vector<16x32xbf16>
    %c0_1 = arith.constant 0 : index
    %c0_2 = arith.constant 0 : index
    %9 = vector.load %arg2[%c0_1, %c0_2] : memref<32x64xbf16, #tpu.memory_space<vmem>>, vector<32x64xbf16>
    %cst = arith.constant dense<0.000000e+00> : vector<16x64xf32>
    %10 = tpu.matmul %8, %9, %cst {dimension_numbers = #tpu.dot_dimension_numbers<[1], [0], [0], [1], [0, 0, 1, 1], [], []>} : vector<16x32xbf16>, vector<32x64xbf16>, vector<16x64xf32> -> vector<16x64xf32>
    %c0_3 = arith.constant 0 : index
    %c0_4 = arith.constant 0 : index
    %11 = vector.load %arg3[%c0_3, %c0_4] : memref<1x64xf32, #tpu.memory_space<vmem>>, vector<1x64xf32>
    %12 = vector.broadcast %11 : vector<1x64xf32> to vector<16x64xf32>
    %13 = arith.addf %10, %12 : vector<16x64xf32>
    %14 = arith.mulf %13, %13 : vector<16x64xf32>
    %cst_5 = arith.constant dense<0.000000e+00> : vector<16xf32>
    %15 = vector.multi_reduction <add>, %14, %cst_5 [1] : vector<16x64xf32> to vector<16xf32>
    %16 = vector.shape_cast %15 : vector<16xf32> to vector<16x1xf32>
    %cst_6 = arith.constant 6.400000e+01 : f32
    %17 = vector.broadcast %cst_6 : f32 to vector<16x1xf32>
    %18 = arith.divf %16, %17 : vector<16x1xf32>
    %cst_7 = arith.constant 9.99999974E-6 : f32
    %19 = vector.broadcast %cst_7 : f32 to vector<16x1xf32>
    %20 = arith.addf %18, %19 : vector<16x1xf32>
    %21 = math.rsqrt %20 : vector<16x1xf32>
    %22 = vector.broadcast %21 : vector<16x1xf32> to vector<16x64xf32>
    %23 = arith.mulf %13, %22 : vector<16x64xf32>
    %c0_8 = arith.constant 0 : index
    %c0_9 = arith.constant 0 : index
    %24 = vector.load %arg4[%c0_8, %c0_9] : memref<1x64xf32, #tpu.memory_space<vmem>>, vector<1x64xf32>
    %25 = vector.broadcast %24 : vector<1x64xf32> to vector<16x64xf32>
    %26 = arith.mulf %23, %25 : vector<16x64xf32>
    %27 = arith.negf %26 : vector<16x64xf32>
    %28 = math.exp %27 : vector<16x64xf32>
    %cst_10 = arith.constant 1.000000e+00 : f32
    %29 = vector.broadcast %cst_10 : f32 to vector<16x64xf32>
    %30 = arith.addf %29, %28 : vector<16x64xf32>
    %31 = arith.divf %29, %30 : vector<16x64xf32>
    %32 = arith.mulf %26, %31 : vector<16x64xf32>
    %33 = arith.truncf %32 : vector<16x64xf32> to vector<16x64xbf16>
    %c0_11 = arith.constant 0 : index
    %c0_12 = arith.constant 0 : index
    %34 = vector.load %arg5[%c0_11, %c0_12] : memref<64x64xbf16, #tpu.memory_space<vmem>>, vector<64x64xbf16>
    %cst_13 = arith.constant dense<0.000000e+00> : vector<16x64xf32>
    %35 = tpu.matmul %33, %34, %cst_13 {dimension_numbers = #tpu.dot_dimension_numbers<[1], [0], [0], [1], [0, 0, 1, 1], [], []>} : vector<16x64xbf16>, vector<64x64xbf16>, vector<16x64xf32> -> vector<16x64xf32>
    %c0_14 = arith.constant 0 : index
    %c0_15 = arith.constant 0 : index
    %36 = vector.load %arg6[%c0_14, %c0_15] : memref<1x64xf32, #tpu.memory_space<vmem>>, vector<1x64xf32>
    %37 = vector.broadcast %36 : vector<1x64xf32> to vector<16x64xf32>
    %38 = arith.addf %35, %37 : vector<16x64xf32>
    %39 = vector.extract_strided_slice %38 {offsets = [0, 0], sizes = [8, 64], strides = [1, 1]} : vector<16x64xf32> to vector<8x64xf32>
    %40 = vector.extract_strided_slice %38 {offsets = [8, 0], sizes = [8, 64], strides = [1, 1]} : vector<16x64xf32> to vector<8x64xf32>
    %41 = arith.maximumf %39, %40 : vector<8x64xf32>
    %42 = arith.truncf %41 : vector<8x64xf32> to vector<8x64xbf16>
    %c0_16 = arith.constant 0 : index
    %c0_17 = arith.constant 0 : index
    %43 = vector.load %arg7[%c0_16, %c0_17] : memref<64x128xbf16, #tpu.memory_space<vmem>>, vector<64x128xbf16>
    %cst_18 = arith.constant dense<0.000000e+00> : vector<8x128xf32>
    %44 = tpu.matmul %42, %43, %cst_18 {dimension_numbers = #tpu.dot_dimension_numbers<[1], [0], [0], [1], [0, 0, 1, 1], [], []>} : vector<8x64xbf16>, vector<64x128xbf16>, vector<8x128xf32> -> vector<8x128xf32>
    %c0_19 = arith.constant 0 : index
    %c0_20 = arith.constant 0 : index
    %45 = vector.load %arg8[%c0_19, %c0_20] : memref<1x128xf32, #tpu.memory_space<vmem>>, vector<1x128xf32>
    %46 = vector.broadcast %45 : vector<1x128xf32> to vector<8x128xf32>
    %47 = arith.addf %44, %46 : vector<8x128xf32>
    %48 = arith.mulf %47, %47 : vector<8x128xf32>
    %cst_21 = arith.constant dense<0.000000e+00> : vector<8xf32>
    %49 = vector.multi_reduction <add>, %48, %cst_21 [1] : vector<8x128xf32> to vector<8xf32>
    %50 = vector.shape_cast %49 : vector<8xf32> to vector<8x1xf32>
    %cst_22 = arith.constant 1.280000e+02 : f32
    %51 = vector.broadcast %cst_22 : f32 to vector<8x1xf32>
    %52 = arith.divf %50, %51 : vector<8x1xf32>
    %cst_23 = arith.constant 9.99999974E-6 : f32
    %53 = vector.broadcast %cst_23 : f32 to vector<8x1xf32>
    %54 = arith.addf %52, %53 : vector<8x1xf32>
    %55 = math.rsqrt %54 : vector<8x1xf32>
    %56 = vector.broadcast %55 : vector<8x1xf32> to vector<8x128xf32>
    %57 = arith.mulf %47, %56 : vector<8x128xf32>
    %c0_24 = arith.constant 0 : index
    %c0_25 = arith.constant 0 : index
    %58 = vector.load %arg9[%c0_24, %c0_25] : memref<1x128xf32, #tpu.memory_space<vmem>>, vector<1x128xf32>
    %59 = vector.broadcast %58 : vector<1x128xf32> to vector<8x128xf32>
    %60 = arith.mulf %57, %59 : vector<8x128xf32>
    %61 = arith.negf %60 : vector<8x128xf32>
    %62 = math.exp %61 : vector<8x128xf32>
    %cst_26 = arith.constant 1.000000e+00 : f32
    %63 = vector.broadcast %cst_26 : f32 to vector<8x128xf32>
    %64 = arith.addf %63, %62 : vector<8x128xf32>
    %65 = arith.divf %63, %64 : vector<8x128xf32>
    %66 = arith.mulf %60, %65 : vector<8x128xf32>
    %67 = arith.truncf %66 : vector<8x128xf32> to vector<8x128xbf16>
    %c0_27 = arith.constant 0 : index
    %c0_28 = arith.constant 0 : index
    %68 = vector.load %arg10[%c0_27, %c0_28] : memref<128x128xbf16, #tpu.memory_space<vmem>>, vector<128x128xbf16>
    %cst_29 = arith.constant dense<0.000000e+00> : vector<8x128xf32>
    %69 = tpu.matmul %67, %68, %cst_29 {dimension_numbers = #tpu.dot_dimension_numbers<[1], [0], [0], [1], [0, 0, 1, 1], [], []>} : vector<8x128xbf16>, vector<128x128xbf16>, vector<8x128xf32> -> vector<8x128xf32>
    %c0_30 = arith.constant 0 : index
    %c0_31 = arith.constant 0 : index
    %70 = vector.load %arg11[%c0_30, %c0_31] : memref<1x128xf32, #tpu.memory_space<vmem>>, vector<1x128xf32>
    %71 = vector.broadcast %70 : vector<1x128xf32> to vector<8x128xf32>
    %72 = arith.addf %69, %71 : vector<8x128xf32>
    %73 = arith.truncf %72 : vector<8x128xf32> to vector<8x128xbf16>
    %c0_32 = arith.constant 0 : index
    %c0_33 = arith.constant 0 : index
    %74 = vector.load %arg12[%c0_32, %c0_33] : memref<128x256xbf16, #tpu.memory_space<vmem>>, vector<128x256xbf16>
    %cst_34 = arith.constant dense<0.000000e+00> : vector<8x256xf32>
    %75 = tpu.matmul %73, %74, %cst_34 {dimension_numbers = #tpu.dot_dimension_numbers<[1], [0], [0], [1], [0, 0, 1, 1], [], []>} : vector<8x128xbf16>, vector<128x256xbf16>, vector<8x256xf32> -> vector<8x256xf32>
    %c0_35 = arith.constant 0 : index
    %c0_36 = arith.constant 0 : index
    %76 = vector.load %arg13[%c0_35, %c0_36] : memref<1x256xf32, #tpu.memory_space<vmem>>, vector<1x256xf32>
    %77 = vector.broadcast %76 : vector<1x256xf32> to vector<8x256xf32>
    %78 = arith.addf %75, %77 : vector<8x256xf32>
    %79 = vector.extract_strided_slice %78 {offsets = [0, 0], sizes = [8, 128], strides = [1, 1]} : vector<8x256xf32> to vector<8x128xf32>
    %80 = vector.extract_strided_slice %78 {offsets = [0, 128], sizes = [8, 128], strides = [1, 1]} : vector<8x256xf32> to vector<8x128xf32>
    %81 = tpu.concatenate %79, %80 in 0 : vector<8x128xf32>, vector<8x128xf32> -> vector<16x128xf32>
    %82 = arith.truncf %81 : vector<16x128xf32> to vector<16x128xbf16>
    %c0_37 = arith.constant 0 : index
    %c0_38 = arith.constant 0 : index
    %83 = vector.load %arg14[%c0_37, %c0_38] : memref<128x64xbf16, #tpu.memory_space<vmem>>, vector<128x64xbf16>
    %cst_39 = arith.constant dense<0.000000e+00> : vector<16x64xf32>
    %84 = tpu.matmul %82, %83, %cst_39 {dimension_numbers = #tpu.dot_dimension_numbers<[1], [0], [0], [1], [0, 0, 1, 1], [], []>} : vector<16x128xbf16>, vector<128x64xbf16>, vector<16x64xf32> -> vector<16x64xf32>
    %85 = arith.truncf %38 : vector<16x64xf32> to vector<16x64xbf16>
    %c0_40 = arith.constant 0 : index
    %c0_41 = arith.constant 0 : index
    %86 = vector.load %arg15[%c0_40, %c0_41] : memref<64x64xbf16, #tpu.memory_space<vmem>>, vector<64x64xbf16>
    %cst_42 = arith.constant dense<0.000000e+00> : vector<16x64xf32>
    %87 = tpu.matmul %85, %86, %cst_42 {dimension_numbers = #tpu.dot_dimension_numbers<[1], [0], [0], [1], [0, 0, 1, 1], [], []>} : vector<16x64xbf16>, vector<64x64xbf16>, vector<16x64xf32> -> vector<16x64xf32>
    %88 = arith.addf %84, %87 : vector<16x64xf32>
    %c0_43 = arith.constant 0 : index
    %c0_44 = arith.constant 0 : index
    %89 = vector.load %arg16[%c0_43, %c0_44] : memref<1x64xf32, #tpu.memory_space<vmem>>, vector<1x64xf32>
    %90 = vector.broadcast %89 : vector<1x64xf32> to vector<16x64xf32>
    %91 = arith.addf %88, %90 : vector<16x64xf32>
    %92 = arith.mulf %91, %91 : vector<16x64xf32>
    %cst_45 = arith.constant dense<0.000000e+00> : vector<16xf32>
    %93 = vector.multi_reduction <add>, %92, %cst_45 [1] : vector<16x64xf32> to vector<16xf32>
    %94 = vector.shape_cast %93 : vector<16xf32> to vector<16x1xf32>
    %cst_46 = arith.constant 6.400000e+01 : f32
    %95 = vector.broadcast %cst_46 : f32 to vector<16x1xf32>
    %96 = arith.divf %94, %95 : vector<16x1xf32>
    %cst_47 = arith.constant 9.99999974E-6 : f32
    %97 = vector.broadcast %cst_47 : f32 to vector<16x1xf32>
    %98 = arith.addf %96, %97 : vector<16x1xf32>
    %99 = math.rsqrt %98 : vector<16x1xf32>
    %100 = vector.broadcast %99 : vector<16x1xf32> to vector<16x64xf32>
    %101 = arith.mulf %91, %100 : vector<16x64xf32>
    %c0_48 = arith.constant 0 : index
    %c0_49 = arith.constant 0 : index
    %102 = vector.load %arg17[%c0_48, %c0_49] : memref<1x64xf32, #tpu.memory_space<vmem>>, vector<1x64xf32>
    %103 = vector.broadcast %102 : vector<1x64xf32> to vector<16x64xf32>
    %104 = arith.mulf %101, %103 : vector<16x64xf32>
    %105 = arith.negf %104 : vector<16x64xf32>
    %106 = math.exp %105 : vector<16x64xf32>
    %cst_50 = arith.constant 1.000000e+00 : f32
    %107 = vector.broadcast %cst_50 : f32 to vector<16x64xf32>
    %108 = arith.addf %107, %106 : vector<16x64xf32>
    %109 = arith.divf %107, %108 : vector<16x64xf32>
    %110 = arith.mulf %104, %109 : vector<16x64xf32>
    %111 = arith.truncf %110 : vector<16x64xf32> to vector<16x64xbf16>
    %c0_51 = arith.constant 0 : index
    %c0_52 = arith.constant 0 : index
    %112 = vector.load %arg18[%c0_51, %c0_52] : memref<64x64xbf16, #tpu.memory_space<vmem>>, vector<64x64xbf16>
    %cst_53 = arith.constant dense<0.000000e+00> : vector<16x64xf32>
    %113 = tpu.matmul %111, %112, %cst_53 {dimension_numbers = #tpu.dot_dimension_numbers<[1], [0], [0], [1], [0, 0, 1, 1], [], []>} : vector<16x64xbf16>, vector<64x64xbf16>, vector<16x64xf32> -> vector<16x64xf32>
    %c0_54 = arith.constant 0 : index
    %c0_55 = arith.constant 0 : index
    %114 = vector.load %arg19[%c0_54, %c0_55] : memref<1x64xf32, #tpu.memory_space<vmem>>, vector<1x64xf32>
    %115 = vector.broadcast %114 : vector<1x64xf32> to vector<16x64xf32>
    %116 = arith.addf %113, %115 : vector<16x64xf32>
    %117 = arith.truncf %116 : vector<16x64xf32> to vector<16x64xbf16>
    %c0_56 = arith.constant 0 : index
    %c0_57 = arith.constant 0 : index
    %118 = vector.load %arg20[%c0_56, %c0_57] : memref<64x128xbf16, #tpu.memory_space<vmem>>, vector<64x128xbf16>
    %cst_58 = arith.constant dense<0.000000e+00> : vector<16x128xf32>
    %119 = tpu.matmul %117, %118, %cst_58 {dimension_numbers = #tpu.dot_dimension_numbers<[1], [0], [0], [1], [0, 0, 1, 1], [], []>} : vector<16x64xbf16>, vector<64x128xbf16>, vector<16x128xf32> -> vector<16x128xf32>
    %c0_59 = arith.constant 0 : index
    %c0_60 = arith.constant 0 : index
    %120 = vector.load %arg21[%c0_59, %c0_60] : memref<1x128xf32, #tpu.memory_space<vmem>>, vector<1x128xf32>
    %121 = vector.broadcast %120 : vector<1x128xf32> to vector<16x128xf32>
    %122 = arith.addf %119, %121 : vector<16x128xf32>
    %123 = vector.extract_strided_slice %122 {offsets = [0, 0], sizes = [8, 64], strides = [1, 1]} : vector<16x128xf32> to vector<8x64xf32>
    %124 = vector.extract_strided_slice %122 {offsets = [0, 64], sizes = [8, 64], strides = [1, 1]} : vector<16x128xf32> to vector<8x64xf32>
    %125 = vector.extract_strided_slice %122 {offsets = [8, 0], sizes = [8, 64], strides = [1, 1]} : vector<16x128xf32> to vector<8x64xf32>
    %126 = vector.extract_strided_slice %122 {offsets = [8, 64], sizes = [8, 64], strides = [1, 1]} : vector<16x128xf32> to vector<8x64xf32>
    %127 = tpu.concatenate %123, %124, %125, %126 in 0 : vector<8x64xf32>, vector<8x64xf32>, vector<8x64xf32>, vector<8x64xf32> -> vector<32x64xf32>
    %128 = tpu.concatenate %1, %2, %3, %4 in 0 : vector<8x32xf32>, vector<8x32xf32>, vector<8x32xf32>, vector<8x32xf32> -> vector<32x32xf32>
    %129 = arith.truncf %127 : vector<32x64xf32> to vector<32x64xbf16>
    %c0_61 = arith.constant 0 : index
    %c0_62 = arith.constant 0 : index
    %130 = vector.load %arg22[%c0_61, %c0_62] : memref<64x32xbf16, #tpu.memory_space<vmem>>, vector<64x32xbf16>
    %cst_63 = arith.constant dense<0.000000e+00> : vector<32x32xf32>
    %131 = tpu.matmul %129, %130, %cst_63 {dimension_numbers = #tpu.dot_dimension_numbers<[1], [0], [0], [1], [0, 0, 1, 1], [], []>} : vector<32x64xbf16>, vector<64x32xbf16>, vector<32x32xf32> -> vector<32x32xf32>
    %132 = arith.truncf %128 : vector<32x32xf32> to vector<32x32xbf16>
    %c0_64 = arith.constant 0 : index
    %c0_65 = arith.constant 0 : index
    %133 = vector.load %arg23[%c0_64, %c0_65] : memref<32x32xbf16, #tpu.memory_space<vmem>>, vector<32x32xbf16>
    %cst_66 = arith.constant dense<0.000000e+00> : vector<32x32xf32>
    %134 = tpu.matmul %132, %133, %cst_66 {dimension_numbers = #tpu.dot_dimension_numbers<[1], [0], [0], [1], [0, 0, 1, 1], [], []>} : vector<32x32xbf16>, vector<32x32xbf16>, vector<32x32xf32> -> vector<32x32xf32>
    %135 = arith.addf %131, %134 : vector<32x32xf32>
    %c0_67 = arith.constant 0 : index
    %c0_68 = arith.constant 0 : index
    %136 = vector.load %arg24[%c0_67, %c0_68] : memref<1x32xf32, #tpu.memory_space<vmem>>, vector<1x32xf32>
    %137 = vector.broadcast %136 : vector<1x32xf32> to vector<32x32xf32>
    %138 = arith.addf %135, %137 : vector<32x32xf32>
    %139 = arith.mulf %138, %138 : vector<32x32xf32>
    %cst_69 = arith.constant dense<0.000000e+00> : vector<32xf32>
    %140 = vector.multi_reduction <add>, %139, %cst_69 [1] : vector<32x32xf32> to vector<32xf32>
    %141 = vector.shape_cast %140 : vector<32xf32> to vector<32x1xf32>
    %cst_70 = arith.constant 3.200000e+01 : f32
    %142 = vector.broadcast %cst_70 : f32 to vector<32x1xf32>
    %143 = arith.divf %141, %142 : vector<32x1xf32>
    %cst_71 = arith.constant 9.99999974E-6 : f32
    %144 = vector.broadcast %cst_71 : f32 to vector<32x1xf32>
    %145 = arith.addf %143, %144 : vector<32x1xf32>
    %146 = math.rsqrt %145 : vector<32x1xf32>
    %147 = vector.broadcast %146 : vector<32x1xf32> to vector<32x32xf32>
    %148 = arith.mulf %138, %147 : vector<32x32xf32>
    %c0_72 = arith.constant 0 : index
    %c0_73 = arith.constant 0 : index
    %149 = vector.load %arg25[%c0_72, %c0_73] : memref<1x32xf32, #tpu.memory_space<vmem>>, vector<1x32xf32>
    %150 = vector.broadcast %149 : vector<1x32xf32> to vector<32x32xf32>
    %151 = arith.mulf %148, %150 : vector<32x32xf32>
    %152 = arith.negf %151 : vector<32x32xf32>
    %153 = math.exp %152 : vector<32x32xf32>
    %cst_74 = arith.constant 1.000000e+00 : f32
    %154 = vector.broadcast %cst_74 : f32 to vector<32x32xf32>
    %155 = arith.addf %154, %153 : vector<32x32xf32>
    %156 = arith.divf %154, %155 : vector<32x32xf32>
    %157 = arith.mulf %151, %156 : vector<32x32xf32>
    %158 = arith.truncf %157 : vector<32x32xf32> to vector<32x32xbf16>
    %c0_75 = arith.constant 0 : index
    %c0_76 = arith.constant 0 : index
    %159 = vector.load %arg26[%c0_75, %c0_76] : memref<32x32xbf16, #tpu.memory_space<vmem>>, vector<32x32xbf16>
    %cst_77 = arith.constant dense<0.000000e+00> : vector<32x32xf32>
    %160 = tpu.matmul %158, %159, %cst_77 {dimension_numbers = #tpu.dot_dimension_numbers<[1], [0], [0], [1], [0, 0, 1, 1], [], []>} : vector<32x32xbf16>, vector<32x32xbf16>, vector<32x32xf32> -> vector<32x32xf32>
    %c0_78 = arith.constant 0 : index
    %c0_79 = arith.constant 0 : index
    %161 = vector.load %arg27[%c0_78, %c0_79] : memref<1x32xf32, #tpu.memory_space<vmem>>, vector<1x32xf32>
    %162 = vector.broadcast %161 : vector<1x32xf32> to vector<32x32xf32>
    %163 = arith.addf %160, %162 : vector<32x32xf32>
    %164 = vector.extract_strided_slice %163 {offsets = [0, 0], sizes = [8, 32], strides = [1, 1]} : vector<32x32xf32> to vector<8x32xf32>
    %165 = vector.extract_strided_slice %163 {offsets = [8, 0], sizes = [8, 32], strides = [1, 1]} : vector<32x32xf32> to vector<8x32xf32>
    %166 = vector.extract_strided_slice %163 {offsets = [16, 0], sizes = [8, 32], strides = [1, 1]} : vector<32x32xf32> to vector<8x32xf32>
    %167 = vector.extract_strided_slice %163 {offsets = [24, 0], sizes = [8, 32], strides = [1, 1]} : vector<32x32xf32> to vector<8x32xf32>
    %168 = tpu.concatenate %164, %165, %166, %167 in 1 : vector<8x32xf32>, vector<8x32xf32>, vector<8x32xf32>, vector<8x32xf32> -> vector<8x128xf32>
    %c0_80 = arith.constant 0 : index
    %c0_81 = arith.constant 0 : index
    %169 = vector.load %arg28[%c0_80, %c0_81] : memref<8x128xf32, #tpu.memory_space<vmem>>, vector<8x128xf32>
    tpu.vector_store %arg28[%c0_80, %c0_81], %168 {strides = array<i32>} : memref<8x128xf32, #tpu.memory_space<vmem>>, vector<8x128xf32>,
    return
  }
  func.func @transform_0(%arg0: i32) -> (i32, i32) {
    %c0_i32 = arith.constant 0 : i32
    %c0_i32_0 = arith.constant 0 : i32
    return %arg0, %c0_i32 : i32, i32
  }
  func.func @transform_1(%arg0: i32) -> (i32, i32) {
    %c0_i32 = arith.constant 0 : i32
    %c0_i32_0 = arith.constant 0 : i32
    %c0_i32_1 = arith.constant 0 : i32
    return %c0_i32, %c0_i32_0 : i32, i32
  }
  func.func @transform_2(%arg0: i32) -> (i32, i32) {
    %c0_i32 = arith.constant 0 : i32
    %c0_i32_0 = arith.constant 0 : i32
    %c0_i32_1 = arith.constant 0 : i32
    return %c0_i32, %c0_i32_0 : i32, i32
  }
  func.func @transform_3(%arg0: i32) -> (i32, i32) {
    %c0_i32 = arith.constant 0 : i32
    %c0_i32_0 = arith.constant 0 : i32
    %c0_i32_1 = arith.constant 0 : i32
    return %c0_i32, %c0_i32_0 : i32, i32
  }
  func.func @transform_4(%arg0: i32) -> (i32, i32) {
    %c0_i32 = arith.constant 0 : i32
    %c0_i32_0 = arith.constant 0 : i32
    %c0_i32_1 = arith.constant 0 : i32
    return %c0_i32, %c0_i32_0 : i32, i32
  }
  func.func @transform_5(%arg0: i32) -> (i32, i32) {
    %c0_i32 = arith.constant 0 : i32
    %c0_i32_0 = arith.constant 0 : i32
    %c0_i32_1 = arith.constant 0 : i32
    return %c0_i32, %c0_i32_0 : i32, i32
  }
  func.func @transform_6(%arg0: i32) -> (i32, i32) {
    %c0_i32 = arith.constant 0 : i32
    %c0_i32_0 = arith.constant 0 : i32
    %c0_i32_1 = arith.constant 0 : i32
    return %c0_i32, %c0_i32_0 : i32, i32
  }
  func.func @transform_7(%arg0: i32) -> (i32, i32) {
    %c0_i32 = arith.constant 0 : i32
    %c0_i32_0 = arith.constant 0 : i32
    %c0_i32_1 = arith.constant 0 : i32
    return %c0_i32, %c0_i32_0 : i32, i32
  }
  func.func @transform_8(%arg0: i32) -> (i32, i32) {
    %c0_i32 = arith.constant 0 : i32
    %c0_i32_0 = arith.constant 0 : i32
    %c0_i32_1 = arith.constant 0 : i32
    return %c0_i32, %c0_i32_0 : i32, i32
  }
  func.func @transform_9(%arg0: i32) -> (i32, i32) {
    %c0_i32 = arith.constant 0 : i32
    %c0_i32_0 = arith.constant 0 : i32
    %c0_i32_1 = arith.constant 0 : i32
    return %c0_i32, %c0_i32_0 : i32, i32
  }
  func.func @transform_10(%arg0: i32) -> (i32, i32) {
    %c0_i32 = arith.constant 0 : i32
    %c0_i32_0 = arith.constant 0 : i32
    %c0_i32_1 = arith.constant 0 : i32
    return %c0_i32, %c0_i32_0 : i32, i32
  }
  func.func @transform_11(%arg0: i32) -> (i32, i32) {
    %c0_i32 = arith.constant 0 : i32
    %c0_i32_0 = arith.constant 0 : i32
    %c0_i32_1 = arith.constant 0 : i32
    return %c0_i32, %c0_i32_0 : i32, i32
  }
  func.func @transform_12(%arg0: i32) -> (i32, i32) {
    %c0_i32 = arith.constant 0 : i32
    %c0_i32_0 = arith.constant 0 : i32
    %c0_i32_1 = arith.constant 0 : i32
    return %c0_i32, %c0_i32_0 : i32, i32
  }
  func.func @transform_13(%arg0: i32) -> (i32, i32) {
    %c0_i32 = arith.constant 0 : i32
    %c0_i32_0 = arith.constant 0 : i32
    %c0_i32_1 = arith.constant 0 : i32
    return %c0_i32, %c0_i32_0 : i32, i32
  }
  func.func @transform_14(%arg0: i32) -> (i32, i32) {
    %c0_i32 = arith.constant 0 : i32
    %c0_i32_0 = arith.constant 0 : i32
    %c0_i32_1 = arith.constant 0 : i32
    return %c0_i32, %c0_i32_0 : i32, i32
  }
  func.func @transform_15(%arg0: i32) -> (i32, i32) {
    %c0_i32 = arith.constant 0 : i32
    %c0_i32_0 = arith.constant 0 : i32
    %c0_i32_1 = arith.constant 0 : i32
    return %c0_i32, %c0_i32_0 : i32, i32
  }
  func.func @transform_16(%arg0: i32) -> (i32, i32) {
    %c0_i32 = arith.constant 0 : i32
    %c0_i32_0 = arith.constant 0 : i32
    %c0_i32_1 = arith.constant 0 : i32
    return %c0_i32, %c0_i32_0 : i32, i32
  }
  func.func @transform_17(%arg0: i32) -> (i32, i32) {
    %c0_i32 = arith.constant 0 : i32
    %c0_i32_0 = arith.constant 0 : i32
    %c0_i32_1 = arith.constant 0 : i32
    return %c0_i32, %c0_i32_0 : i32, i32
  }
  func.func @transform_18(%arg0: i32) -> (i32, i32) {
    %c0_i32 = arith.constant 0 : i32
    %c0_i32_0 = arith.constant 0 : i32
    %c0_i32_1 = arith.constant 0 : i32
    return %c0_i32, %c0_i32_0 : i32, i32
  }
  func.func @transform_19(%arg0: i32) -> (i32, i32) {
    %c0_i32 = arith.constant 0 : i32
    %c0_i32_0 = arith.constant 0 : i32
    %c0_i32_1 = arith.constant 0 : i32
    return %c0_i32, %c0_i32_0 : i32, i32
  }
  func.func @transform_20(%arg0: i32) -> (i32, i32) {
    %c0_i32 = arith.constant 0 : i32
    %c0_i32_0 = arith.constant 0 : i32
    %c0_i32_1 = arith.constant 0 : i32
    return %c0_i32, %c0_i32_0 : i32, i32
  }
  func.func @transform_21(%arg0: i32) -> (i32, i32) {
    %c0_i32 = arith.constant 0 : i32
    %c0_i32_0 = arith.constant 0 : i32
    %c0_i32_1 = arith.constant 0 : i32
    return %c0_i32, %c0_i32_0 : i32, i32
  }
  func.func @transform_22(%arg0: i32) -> (i32, i32) {
    %c0_i32 = arith.constant 0 : i32
    %c0_i32_0 = arith.constant 0 : i32
    %c0_i32_1 = arith.constant 0 : i32
    return %c0_i32, %c0_i32_0 : i32, i32
  }
  func.func @transform_23(%arg0: i32) -> (i32, i32) {
    %c0_i32 = arith.constant 0 : i32
    %c0_i32_0 = arith.constant 0 : i32
    %c0_i32_1 = arith.constant 0 : i32
    return %c0_i32, %c0_i32_0 : i32, i32
  }
  func.func @transform_24(%arg0: i32) -> (i32, i32) {
    %c0_i32 = arith.constant 0 : i32
    %c0_i32_0 = arith.constant 0 : i32
    %c0_i32_1 = arith.constant 0 : i32
    return %c0_i32, %c0_i32_0 : i32, i32
  }
  func.func @transform_25(%arg0: i32) -> (i32, i32) {
    %c0_i32 = arith.constant 0 : i32
    %c0_i32_0 = arith.constant 0 : i32
    %c0_i32_1 = arith.constant 0 : i32
    return %c0_i32, %c0_i32_0 : i32, i32
  }
  func.func @transform_26(%arg0: i32) -> (i32, i32) {
    %c0_i32 = arith.constant 0 : i32
    %c0_i32_0 = arith.constant 0 : i32
    %c0_i32_1 = arith.constant 0 : i32
    return %c0_i32, %c0_i32_0 : i32, i32
  }
  func.func @transform_27(%arg0: i32) -> (i32, i32) {
    %c0_i32 = arith.constant 0 : i32
    %c0_i32_0 = arith.constant 0 : i32
    return %arg0, %c0_i32 : i32, i32
  }
}

</mosaic_0001>

<llo_original>
// kernel: diff_motion_unet.1
$region0: #{diff_motion_unet.1}
  #allocation0 [shape = 'u32[]', space=smem, size = 0x4, offset = 0x4, fixed_abs, tag = 'smem constant byte address 0x4 - core index']
  #allocation1 [shape = 'u32[144,128]{1,0:T(1,128)}', space=vmem, size = 0x12000, scoped, tag = 'internal scratch']
  %s0 = inlined_call_operand.vmem [shape: f32[8,128], index: 0, kind: input, shape index: {}]
  %s1 = inlined_call_operand.vmem [shape: bf16[32,64], index: 1, kind: input, shape index: {}]
  %s2 = inlined_call_operand.vmem [shape: f32[1,64], index: 2, kind: input, shape index: {}]
  %s3 = inlined_call_operand.vmem [shape: f32[1,64], index: 3, kind: input, shape index: {}]
  %s4 = inlined_call_operand.vmem [shape: bf16[64,64], index: 4, kind: input, shape index: {}]
  %s5 = inlined_call_operand.vmem [shape: f32[1,64], index: 5, kind: input, shape index: {}]
  %s6 = inlined_call_operand.vmem [shape: bf16[64,128], index: 6, kind: input, shape index: {}]
  %s7 = inlined_call_operand.vmem [shape: f32[1,128], index: 7, kind: input, shape index: {}]
  %s8 = inlined_call_operand.vmem [shape: f32[1,128], index: 8, kind: input, shape index: {}]
  %s9 = inlined_call_operand.vmem [shape: bf16[128,128], index: 9, kind: input, shape index: {}]
  %s10 = inlined_call_operand.vmem [shape: f32[1,128], index: 10, kind: input, shape index: {}]
  %s11 = inlined_call_operand.vmem [shape: bf16[128,256], index: 11, kind: input, shape index: {}]
  %s12 = inlined_call_operand.vmem [shape: f32[1,256], index: 12, kind: input, shape index: {}]
  %s13 = inlined_call_operand.vmem [shape: bf16[128,64], index: 13, kind: input, shape index: {}]
  %s14 = inlined_call_operand.vmem [shape: bf16[64,64], index: 14, kind: input, shape index: {}]
  %s15 = inlined_call_operand.vmem [shape: f32[1,64], index: 15, kind: input, shape index: {}]
  %s16 = inlined_call_operand.vmem [shape: f32[1,64], index: 16, kind: input, shape index: {}]
  %s17 = inlined_call_operand.vmem [shape: bf16[64,64], index: 17, kind: input, shape index: {}]
  %s18 = inlined_call_operand.vmem [shape: f32[1,64], index: 18, kind: input, shape index: {}]
  %s19 = inlined_call_operand.vmem [shape: bf16[64,128], index: 19, kind: input, shape index: {}]
  %s20 = inlined_call_operand.vmem [shape: f32[1,128], index: 20, kind: input, shape index: {}]
  %s21 = inlined_call_operand.vmem [shape: bf16[64,32], index: 21, kind: input, shape index: {}]
  %s22 = inlined_call_operand.vmem [shape: bf16[32,32], index: 22, kind: input, shape index: {}]
  %s23 = inlined_call_operand.vmem [shape: f32[1,32], index: 23, kind: input, shape index: {}]
  %s24 = inlined_call_operand.vmem [shape: f32[1,32], index: 24, kind: input, shape index: {}]
  %s25 = inlined_call_operand.vmem [shape: bf16[32,32], index: 25, kind: input, shape index: {}]
  %s26 = inlined_call_operand.vmem [shape: f32[1,32], index: 26, kind: input, shape index: {}]
  %s27 = inlined_call_operand.vmem [shape: f32[8,128], index: 27, kind: output, shape index: {}]
  %s28 = sld [smem:[#allocation0]]
  $region118: #{diff_motion_unet.1} parent=0
    _
  %s30 = ssub.s32 1, %s28
  %s31 = scalar_select 0, %s30, %s28
  // Predicated region
  $region2: #{diff_motion_unet.1} parent=0 // pred_check
    _
  $region3: #{diff_motion_unet.1} parent=0 // pred_check_branch
    %33 = sbr.rel (0) target = $region5
  $region4: #{diff_motion_unet.1} parent=0 // pred_region
    _
  $region5: #{diff_motion_unet.1} parent=0 // pred_fallthru
    _
  // Predicated region
  $region6: #{diff_motion_unet.1} parent=0 // pred_check
    _
  $region7: #{diff_motion_unet.1} parent=0 // pred_check_branch
    %35 = sbr.rel (0) target = $region9
  $region8: #{diff_motion_unet.1} parent=0 // pred_region
    _
  $region9: #{diff_motion_unet.1} parent=0 // pred_fallthru
    _
  // Predicated region
  $region10: #{diff_motion_unet.1} parent=0 // pred_check
    _
  $region11: #{diff_motion_unet.1} parent=0 // pred_check_branch
    %37 = sbr.rel (0) target = $region13
  $region12: #{diff_motion_unet.1} parent=0 // pred_region
    _
  $region13: #{diff_motion_unet.1} parent=0 // pred_fallthru
    _
  // Predicated region
  $region14: #{diff_motion_unet.1} parent=0 // pred_check
    _
  $region15: #{diff_motion_unet.1} parent=0 // pred_check_branch
    %39 = sbr.rel (0) target = $region17
  $region16: #{diff_motion_unet.1} parent=0 // pred_region
    _
  $region17: #{diff_motion_unet.1} parent=0 // pred_fallthru
    _
  // Predicated region
  $region18: #{diff_motion_unet.1} parent=0 // pred_check
    _
  $region19: #{diff_motion_unet.1} parent=0 // pred_check_branch
    %41 = sbr.rel (0) target = $region21
  $region20: #{diff_motion_unet.1} parent=0 // pred_region
    _
  $region21: #{diff_motion_unet.1} parent=0 // pred_fallthru
    _
  // Predicated region
  $region22: #{diff_motion_unet.1} parent=0 // pred_check
    _
  $region23: #{diff_motion_unet.1} parent=0 // pred_check_branch
    %43 = sbr.rel (0) target = $region25
  $region24: #{diff_motion_unet.1} parent=0 // pred_region
    _
  $region25: #{diff_motion_unet.1} parent=0 // pred_fallthru
    _
  // Predicated region
  $region26: #{diff_motion_unet.1} parent=0 // pred_check
    _
  $region27: #{diff_motion_unet.1} parent=0 // pred_check_branch
    %45 = sbr.rel (0) target = $region29
  $region28: #{diff_motion_unet.1} parent=0 // pred_region
    _
  $region29: #{diff_motion_unet.1} parent=0 // pred_fallthru
    _
  // Predicated region
  $region30: #{diff_motion_unet.1} parent=0 // pred_check
    _
  $region31: #{diff_motion_unet.1} parent=0 // pred_check_branch
    %47 = sbr.rel (0) target = $region33
  $region32: #{diff_motion_unet.1} parent=0 // pred_region
    _
  $region33: #{diff_motion_unet.1} parent=0 // pred_fallthru
    _
  // Predicated region
  $region34: #{diff_motion_unet.1} parent=0 // pred_check
    _
  $region35: #{diff_motion_unet.1} parent=0 // pred_check_branch
    %49 = sbr.rel (0) target = $region37
  $region36: #{diff_motion_unet.1} parent=0 // pred_region
    _
  $region37: #{diff_motion_unet.1} parent=0 // pred_fallthru
    _
  // Predicated region
  $region38: #{diff_motion_unet.1} parent=0 // pred_check
    _
  $region39: #{diff_motion_unet.1} parent=0 // pred_check_branch
    %51 = sbr.rel (0) target = $region41
  $region40: #{diff_motion_unet.1} parent=0 // pred_region
    _
  $region41: #{diff_motion_unet.1} parent=0 // pred_fallthru
    _
  // Predicated region
  $region42: #{diff_motion_unet.1} parent=0 // pred_check
    _
  $region43: #{diff_motion_unet.1} parent=0 // pred_check_branch
    %53 = sbr.rel (0) target = $region45
  $region44: #{diff_motion_unet.1} parent=0 // pred_region
    _
  $region45: #{diff_motion_unet.1} parent=0 // pred_fallthru
    _
  // Predicated region
  $region46: #{diff_motion_unet.1} parent=0 // pred_check
    _
  $region47: #{diff_motion_unet.1} parent=0 // pred_check_branch
    %55 = sbr.rel (0) target = $region49
  $region48: #{diff_motion_unet.1} parent=0 // pred_region
    _
  $region49: #{diff_motion_unet.1} parent=0 // pred_fallthru
    _
  // Predicated region
  $region50: #{diff_motion_unet.1} parent=0 // pred_check
    _
  $region51: #{diff_motion_unet.1} parent=0 // pred_check_branch
    %57 = sbr.rel (0) target = $region53
  $region52: #{diff_motion_unet.1} parent=0 // pred_region
    _
  $region53: #{diff_motion_unet.1} parent=0 // pred_fallthru
    _
  // Predicated region
  $region54: #{diff_motion_unet.1} parent=0 // pred_check
    _
  $region55: #{diff_motion_unet.1} parent=0 // pred_check_branch
    %59 = sbr.rel (0) target = $region57
  $region56: #{diff_motion_unet.1} parent=0 // pred_region
    _
  $region57: #{diff_motion_unet.1} parent=0 // pred_fallthru
    _
  // Predicated region
  $region58: #{diff_motion_unet.1} parent=0 // pred_check
    _
  $region59: #{diff_motion_unet.1} parent=0 // pred_check_branch
    %61 = sbr.rel (0) target = $region61
  $region60: #{diff_motion_unet.1} parent=0 // pred_region
    _
  $region61: #{diff_motion_unet.1} parent=0 // pred_fallthru
    _
  // Predicated region
  $region62: #{diff_motion_unet.1} parent=0 // pred_check
    _
  $region63: #{diff_motion_unet.1} parent=0 // pred_check_branch
    %63 = sbr.rel (0) target = $region65
  $region64: #{diff_motion_unet.1} parent=0 // pred_region
    _
  $region65: #{diff_motion_unet.1} parent=0 // pred_fallthru
    _
  // Predicated region
  $region66: #{diff_motion_unet.1} parent=0 // pred_check
    _
  $region67: #{diff_motion_unet.1} parent=0 // pred_check_branch
    %65 = sbr.rel (0) target = $region69
  $region68: #{diff_motion_unet.1} parent=0 // pred_region
    _
  $region69: #{diff_motion_unet.1} parent=0 // pred_fallthru
    _
  // Predicated region
  $region70: #{diff_motion_unet.1} parent=0 // pred_check
    _
  $region71: #{diff_motion_unet.1} parent=0 // pred_check_branch
    %67 = sbr.rel (0) target = $region73
  $region72: #{diff_motion_unet.1} parent=0 // pred_region
    _
  $region73: #{diff_motion_unet.1} parent=0 // pred_fallthru
    _
  // Predicated region
  $region74: #{diff_motion_unet.1} parent=0 // pred_check
    _
  $region75: #{diff_motion_unet.1} parent=0 // pred_check_branch
    %69 = sbr.rel (0) target = $region77
  $region76: #{diff_motion_unet.1} parent=0 // pred_region
    _
  $region77: #{diff_motion_unet.1} parent=0 // pred_fallthru
    _
  // Predicated region
  $region78: #{diff_motion_unet.1} parent=0 // pred_check
    _
  $region79: #{diff_motion_unet.1} parent=0 // pred_check_branch
    %71 = sbr.rel (0) target = $region81
  $region80: #{diff_motion_unet.1} parent=0 // pred_region
    _
  $region81: #{diff_motion_unet.1} parent=0 // pred_fallthru
    _
  // Predicated region
  $region82: #{diff_motion_unet.1} parent=0 // pred_check
    _
  $region83: #{diff_motion_unet.1} parent=0 // pred_check_branch
    %73 = sbr.rel (0) target = $region85
  $region84: #{diff_motion_unet.1} parent=0 // pred_region
    _
  $region85: #{diff_motion_unet.1} parent=0 // pred_fallthru
    _
  // Predicated region
  $region86: #{diff_motion_unet.1} parent=0 // pred_check
    _
  $region87: #{diff_motion_unet.1} parent=0 // pred_check_branch
    %75 = sbr.rel (0) target = $region89
  $region88: #{diff_motion_unet.1} parent=0 // pred_region
    _
  $region89: #{diff_motion_unet.1} parent=0 // pred_fallthru
    _
  // Predicated region
  $region90: #{diff_motion_unet.1} parent=0 // pred_check
    _
  $region91: #{diff_motion_unet.1} parent=0 // pred_check_branch
    %77 = sbr.rel (0) target = $region93
  $region92: #{diff_motion_unet.1} parent=0 // pred_region
    _
  $region93: #{diff_motion_unet.1} parent=0 // pred_fallthru
    _
  // Predicated region
  $region94: #{diff_motion_unet.1} parent=0 // pred_check
    _
  $region95: #{diff_motion_unet.1} parent=0 // pred_check_branch
    %79 = sbr.rel (0) target = $region97
  $region96: #{diff_motion_unet.1} parent=0 // pred_region
    _
  $region97: #{diff_motion_unet.1} parent=0 // pred_fallthru
    _
  // Predicated region
  $region98: #{diff_motion_unet.1} parent=0 // pred_check
    _
  $region99: #{diff_motion_unet.1} parent=0 // pred_check_branch
    %81 = sbr.rel (0) target = $region101
  $region100: #{diff_motion_unet.1} parent=0 // pred_region
    _
  $region101: #{diff_motion_unet.1} parent=0 // pred_fallthru
    _
  // Predicated region
  $region102: #{diff_motion_unet.1} parent=0 // pred_check
    _
  $region103: #{diff_motion_unet.1} parent=0 // pred_check_branch
    %83 = sbr.rel (0) target = $region105
  $region104: #{diff_motion_unet.1} parent=0 // pred_region
    _
  $region105: #{diff_motion_unet.1} parent=0 // pred_fallthru
    _
  // Predicated region
  $region106: #{diff_motion_unet.1} parent=0 // pred_check
    _
  $region107: #{diff_motion_unet.1} parent=0 // pred_check_branch
    %85 = sbr.rel (0) target = $region109
  $region108: #{diff_motion_unet.1} parent=0 // pred_region
    _
  $region109: #{diff_motion_unet.1} parent=0 // pred_fallthru
    _
  %v87 = vld [vmem:[%s0] sm:$0xff]
  %89 = vrot.lane.b32.xlu0 %v87, 96
  %v90 = vpop.permute.xlu0 %89
  %v92 = vmax.f32 %v87, %v90
  %94 = vrot.lane.b32.xlu0 %v92, 64
  %v95 = vpop.permute.xlu0 %94
  %v97 = vpack.c.bf16 %v95, %v92
  %v98 = vld [vmem:[%s1] sm:$0xf]
  %v99 = vld [vmem:[%s1 + $0x4] sm:$0xf]
  %v100 = vld [vmem:[%s1 + $0x8] sm:$0xf]
  %v101 = vld [vmem:[%s1 + $0xc] sm:$0xf]
  %v102 = vld [vmem:[%s2] sm:$0x1]
  %v104 = vlaneseq
  %v105 = vshrl.u32 %v104, 7
  %v106 = vsub.s32 0, %v105
  %v107 = vrot.slane %v102, %v106
  %v113 = vunpack.c.l.b16 %v98
  %v114 = vunpack.c.l.b16 %v99
  %v115 = vunpack.c.l.b16 %v100
  %v116 = vunpack.c.l.b16 %v101
  %v117 = vpack.c.b16 %v114, %v113
  %v118 = vpack.c.b16 %v116, %v115
  %vm121 = vcmask 261120
  %v123 = vsel %vm121, %v97, 0
  %125 = vmatprep.subr.bf16.mxu0 0
  %126 = vmatpush1.bf16.msra.mxu0 %v117
  %127 = vmatprep.subr.bf16.mxu0 0
  %128 = vmatpush1.bf16.msra.mxu0 %v118
  %129 = vmatprep.subr.bf16.mxu0 0
  %130 = vmatpush1.bf16.msra.mxu0 0
  %131 = vmatprep.subr.bf16.mxu0 0
  %132 = vmatpush1.bf16.msra.mxu0 0
  %133 = vmatprep.subr.bf16.mxu0 0
  %134 = vmatpush1.bf16.msra.mxu0 0
  %135 = vmatprep.subr.bf16.mxu0 0
  %136 = vmatpush1.bf16.msra.mxu0 0
  %137 = vmatprep.subr.bf16.mxu0 0
  %138 = vmatpush1.bf16.msra.mxu0 0
  %139 = vmatprep.subr.bf16.mxu0 0
  %140 = vmatpush1.bf16.msra.mxu0 0
  %141 = vmatprep.subr.bf16.mxu0 0
  %142 = vmatpush1.bf16.msra.mxu0 0
  %143 = vmatprep.subr.bf16.mxu0 0
  %144 = vmatpush1.bf16.msra.mxu0 0
  %145 = vmatprep.subr.bf16.mxu0 0
  %146 = vmatpush1.bf16.msra.mxu0 0
  %147 = vmatprep.subr.bf16.mxu0 0
  %148 = vmatpush1.bf16.msra.mxu0 0
  %149 = vmatprep.subr.bf16.mxu0 0
  %150 = vmatpush1.bf16.msra.mxu0 0
  %151 = vmatprep.subr.bf16.mxu0 0
  %152 = vmatpush1.bf16.msra.mxu0 0
  %153 = vmatprep.subr.bf16.mxu0 0
  %154 = vmatpush1.bf16.msra.mxu0 0
  %155 = vmatprep.subr.bf16.mxu0 0
  %156 = vmatpush1.bf16.msra.mxu0 0
  %157 = vmatprep.mubr.bf16.mxu0 0
  %158 = vmatmul.mubr.bf16.gmra.mrb[0].mxu0 %v123
  %v159 = vpop.f32.mrb[0].mxu0
  %v160 = vadd.f32 %v107, %v159
  %v161 = vpop.f32.mrb[0].mxu0
  %v162 = vpop.f32.mrb[0].mxu0
  %v163 = vadd.f32 %v107, %v162
  %v164 = vpop.f32.mrb[0].mxu0
  %165 = vdwg.mxu0
  %v166 = vmul.f32 %v160, %v160
  %v167 = vmul.f32 %v163, %v163
  %vm168 = vcmask 523264
  %v169 = vsel %vm168, %v166, 0.0
  %170 = vadd.xlane.f32.xlu0 %v169
  %v171 = vpop.xlane.xlu0 %170
  %v172 = vsel %vm168, %v167, 0.0
  %173 = vadd.xlane.f32.xlu0 %v172
  %v174 = vpop.xlane.xlu0 %173
  %v175 = vrcp.pop 64.0
  %v176 = vmul.f32 %v171, %v175
  %v177 = vmul.f32 %v174, %v175
  %v178 = vadd.f32 %v176, 1e-05
  %v179 = vadd.f32 %v177, 1e-05
  %v180 = vrsqrt.pop %v178
  %v181 = vrsqrt.pop %v179
  %v182 = vmul.f32 %v160, %v180
  %v183 = vmul.f32 %v163, %v181
  %v184 = vld [vmem:[%s3] sm:$0x1]
  %v186 = vlaneseq
  %v187 = vshrl.u32 %v186, 7
  %v188 = vsub.s32 0, %v187
  %v189 = vrot.slane %v184, %v188
  %v191 = vmul.f32 %v182, %v189
  %v192 = vmul.f32 %v183, %v189
  %v193 = vxor.u32 %v191, 2147483648
  %v194 = vxor.u32 %v192, 2147483648
  %v195 = vmul.f32 %v193, 1.442695
  %v196 = vpow.pop %v195
  %v197 = vmul.f32 %v194, 1.442695
  %v198 = vpow.pop %v197
  %v199 = vadd.f32 %v196, 1.0
  %v200 = vadd.f32 %v198, 1.0
  %v201 = vrcp.pop %v199
  %v202 = vmul.f32 1.0, %v201
  %v203 = vrcp.pop %v200
  %v204 = vmul.f32 1.0, %v203
  %v205 = vmul.f32 %v191, %v202
  %v206 = vmul.f32 %v192, %v204
  %v207 = vpack.c.bf16 %v206, %v205
  %v208 = vld [vmem:[%s4] sm:$0xf]
  %v209 = vld [vmem:[%s4 + $0x4] sm:$0xf]
  %v210 = vld [vmem:[%s4 + $0x8] sm:$0xf]
  %v211 = vld [vmem:[%s4 + $0xc] sm:$0xf]
  %v212 = vld [vmem:[%s4 + $0x10] sm:$0xf]
  %v213 = vld [vmem:[%s4 + $0x14] sm:$0xf]
  %v214 = vld [vmem:[%s4 + $0x18] sm:$0xf]
  %v215 = vld [vmem:[%s4 + $0x1c] sm:$0xf]
  %v216 = vld [vmem:[%s5] sm:$0x1]
  %v218 = vlaneseq
  %v219 = vshrl.u32 %v218, 7
  %v220 = vsub.s32 0, %v219
  %v221 = vrot.slane %v216, %v220
  %v231 = vunpack.c.l.b16 %v208
  %v232 = vunpack.c.l.b16 %v209
  %v233 = vunpack.c.l.b16 %v210
  %v234 = vunpack.c.l.b16 %v211
  %v235 = vunpack.c.l.b16 %v212
  %v236 = vunpack.c.l.b16 %v213
  %v237 = vunpack.c.l.b16 %v214
  %v238 = vunpack.c.l.b16 %v215
  %v239 = vpack.c.b16 %v232, %v231
  %v240 = vpack.c.b16 %v234, %v233
  %v241 = vpack.c.b16 %v236, %v235
  %v242 = vpack.c.b16 %v238, %v237
  %v248 = vsel %vm168, %v207, 0
  %250 = vmatprep.subr.bf16.mxu0 0
  %251 = vmatpush1.bf16.msra.mxu0 %v239
  %252 = vmatprep.subr.bf16.mxu0 0
  %253 = vmatpush1.bf16.msra.mxu0 %v240
  %254 = vmatprep.subr.bf16.mxu0 0
  %255 = vmatpush1.bf16.msra.mxu0 %v241
  %256 = vmatprep.subr.bf16.mxu0 0
  %257 = vmatpush1.bf16.msra.mxu0 %v242
  %258 = vmatprep.subr.bf16.mxu0 0
  %259 = vmatpush1.bf16.msra.mxu0 0
  %260 = vmatprep.subr.bf16.mxu0 0
  %261 = vmatpush1.bf16.msra.mxu0 0
  %262 = vmatprep.subr.bf16.mxu0 0
  %263 = vmatpush1.bf16.msra.mxu0 0
  %264 = vmatprep.subr.bf16.mxu0 0
  %265 = vmatpush1.bf16.msra.mxu0 0
  %266 = vmatprep.subr.bf16.mxu0 0
  %267 = vmatpush1.bf16.msra.mxu0 0
  %268 = vmatprep.subr.bf16.mxu0 0
  %269 = vmatpush1.bf16.msra.mxu0 0
  %270 = vmatprep.subr.bf16.mxu0 0
  %271 = vmatpush1.bf16.msra.mxu0 0
  %272 = vmatprep.subr.bf16.mxu0 0
  %273 = vmatpush1.bf16.msra.mxu0 0
  %274 = vmatprep.subr.bf16.mxu0 0
  %275 = vmatpush1.bf16.msra.mxu0 0
  %276 = vmatprep.subr.bf16.mxu0 0
  %277 = vmatpush1.bf16.msra.mxu0 0
  %278 = vmatprep.subr.bf16.mxu0 0
  %279 = vmatpush1.bf16.msra.mxu0 0
  %280 = vmatprep.subr.bf16.mxu0 0
  %281 = vmatpush1.bf16.msra.mxu0 0
  %282 = vmatprep.mubr.bf16.mxu0 0
  %283 = vmatmul.mubr.bf16.gmra.mrb[0].mxu0 %v248
  %v284 = vpop.f32.mrb[0].mxu0
  %v285 = vadd.f32 %v221, %v284
  %v286 = vpop.f32.mrb[0].mxu0
  %v287 = vpop.f32.mrb[0].mxu0
  %v288 = vadd.f32 %v221, %v287
  %v289 = vpop.f32.mrb[0].mxu0
  %290 = vdwg.mxu0
  %v291 = vmax.f32 %v285, %v288
  %v292 = vpack.c.bf16 %v291, %v291
  %v293 = vld [vmem:[%s6] sm:$0xf]
  %v294 = vld [vmem:[%s6 + $0x4] sm:$0xf]
  %v295 = vld [vmem:[%s6 + $0x8] sm:$0xf]
  %v296 = vld [vmem:[%s6 + $0xc] sm:$0xf]
  %v297 = vld [vmem:[%s6 + $0x10] sm:$0xf]
  %v298 = vld [vmem:[%s6 + $0x14] sm:$0xf]
  %v299 = vld [vmem:[%s6 + $0x18] sm:$0xf]
  %v300 = vld [vmem:[%s6 + $0x1c] sm:$0xf]
  %v301 = vld [vmem:[%s7] sm:$0x1]
  %v303 = vlaneseq
  %v304 = vshrl.u32 %v303, 7
  %v305 = vsub.s32 0, %v304
  %v306 = vrot.slane %v301, %v305
  %v316 = vunpack.c.l.b16 %v293
  %v317 = vunpack.c.l.b16 %v294
  %v318 = vunpack.c.l.b16 %v295
  %v319 = vunpack.c.l.b16 %v296
  %v320 = vunpack.c.l.b16 %v297
  %v321 = vunpack.c.l.b16 %v298
  %v322 = vunpack.c.l.b16 %v299
  %v323 = vunpack.c.l.b16 %v300
  %v324 = vpack.c.b16 %v317, %v316
  %v325 = vpack.c.b16 %v319, %v318
  %v326 = vpack.c.b16 %v321, %v320
  %v327 = vpack.c.b16 %v323, %v322
  %v333 = vsel %vm168, %v292, 0
  %335 = vmatprep.subr.bf16.mxu0 0
  %336 = vmatpush1.bf16.msra.mxu0 %v324
  %337 = vmatprep.subr.bf16.mxu0 0
  %338 = vmatpush1.bf16.msra.mxu0 %v325
  %339 = vmatprep.subr.bf16.mxu0 0
  %340 = vmatpush1.bf16.msra.mxu0 %v326
  %341 = vmatprep.subr.bf16.mxu0 0
  %342 = vmatpush1.bf16.msra.mxu0 %v327
  %343 = vmatprep.subr.bf16.mxu0 0
  %344 = vmatpush1.bf16.msra.mxu0 0
  %345 = vmatprep.subr.bf16.mxu0 0
  %346 = vmatpush1.bf16.msra.mxu0 0
  %347 = vmatprep.subr.bf16.mxu0 0
  %348 = vmatpush1.bf16.msra.mxu0 0
  %349 = vmatprep.subr.bf16.mxu0 0
  %350 = vmatpush1.bf16.msra.mxu0 0
  %351 = vmatprep.subr.bf16.mxu0 0
  %352 = vmatpush1.bf16.msra.mxu0 0
  %353 = vmatprep.subr.bf16.mxu0 0
  %354 = vmatpush1.bf16.msra.mxu0 0
  %355 = vmatprep.subr.bf16.mxu0 0
  %356 = vmatpush1.bf16.msra.mxu0 0
  %357 = vmatprep.subr.bf16.mxu0 0
  %358 = vmatpush1.bf16.msra.mxu0 0
  %359 = vmatprep.subr.bf16.mxu0 0
  %360 = vmatpush1.bf16.msra.mxu0 0
  %361 = vmatprep.subr.bf16.mxu0 0
  %362 = vmatpush1.bf16.msra.mxu0 0
  %363 = vmatprep.subr.bf16.mxu0 0
  %364 = vmatpush1.bf16.msra.mxu0 0
  %365 = vmatprep.subr.bf16.mxu0 0
  %366 = vmatpush1.bf16.msra.mxu0 0
  %367 = vmatprep.mubr.bf16.mxu0 0
  %368 = vmatmul.mubr.bf16.gmra.mrb[0].mxu0 %v333
  %v369 = vpop.f32.mrb[0].mxu0
  %v370 = vadd.f32 %v306, %v369
  %v371 = vpop.f32.mrb[0].mxu0
  %v372 = vpop.f32.mrb[0].mxu0
  %v373 = vpop.f32.mrb[0].mxu0
  %374 = vdwg.mxu0
  %v375 = vmul.f32 %v370, %v370
  %376 = vadd.xlane.f32.xlu0 %v375
  %v377 = vpop.xlane.xlu0 %376
  %v378 = vrcp.pop 128.0
  %v379 = vmul.f32 %v377, %v378
  %v380 = vadd.f32 %v379, 1e-05
  %v381 = vrsqrt.pop %v380
  %v382 = vmul.f32 %v370, %v381
  %v383 = vld [vmem:[%s8] sm:$0x1]
  %v385 = vlaneseq
  %v386 = vshrl.u32 %v385, 7
  %v387 = vsub.s32 0, %v386
  %v388 = vrot.slane %v383, %v387
  %v390 = vmul.f32 %v382, %v388
  %v391 = vxor.u32 %v390, 2147483648
  %v392 = vmul.f32 %v391, 1.442695
  %v393 = vpow.pop %v392
  %v394 = vadd.f32 %v393, 1.0
  %v395 = vrcp.pop %v394
  %v396 = vmul.f32 1.0, %v395
  %v397 = vmul.f32 %v390, %v396
  %v398 = vpack.c.bf16 %v397, %v397
  %v399 = vld [vmem:[%s9] sm:$0xf]
  %v400 = vld [vmem:[%s9 + $0x4] sm:$0xf]
  %v401 = vld [vmem:[%s9 + $0x8] sm:$0xf]
  %v402 = vld [vmem:[%s9 + $0xc] sm:$0xf]
  %v403 = vld [vmem:[%s9 + $0x10] sm:$0xf]
  %v404 = vld [vmem:[%s9 + $0x14] sm:$0xf]
  %v405 = vld [vmem:[%s9 + $0x18] sm:$0xf]
  %v406 = vld [vmem:[%s9 + $0x1c] sm:$0xf]
  %v407 = vld [vmem:[%s9 + $0x20] sm:$0xf]
  %v408 = vld [vmem:[%s9 + $0x24] sm:$0xf]
  %v409 = vld [vmem:[%s9 + $0x28] sm:$0xf]
  %v410 = vld [vmem:[%s9 + $0x2c] sm:$0xf]
  %v411 = vld [vmem:[%s9 + $0x30] sm:$0xf]
  %v412 = vld [vmem:[%s9 + $0x34] sm:$0xf]
  %v413 = vld [vmem:[%s9 + $0x38] sm:$0xf]
  %v414 = vld [vmem:[%s9 + $0x3c] sm:$0xf]
  %v415 = vld [vmem:[%s10] sm:$0x1]
  %v417 = vlaneseq
  %v418 = vshrl.u32 %v417, 7
  %v419 = vsub.s32 0, %v418
  %v420 = vrot.slane %v415, %v419
  %v438 = vunpack.c.l.b16 %v399
  %v439 = vunpack.c.l.b16 %v400
  %v440 = vunpack.c.l.b16 %v401
  %v441 = vunpack.c.l.b16 %v402
  %v442 = vunpack.c.l.b16 %v403
  %v443 = vunpack.c.l.b16 %v404
  %v444 = vunpack.c.l.b16 %v405
  %v445 = vunpack.c.l.b16 %v406
  %v446 = vunpack.c.l.b16 %v407
  %v447 = vunpack.c.l.b16 %v408
  %v448 = vunpack.c.l.b16 %v409
  %v449 = vunpack.c.l.b16 %v410
  %v450 = vunpack.c.l.b16 %v411
  %v451 = vunpack.c.l.b16 %v412
  %v452 = vunpack.c.l.b16 %v413
  %v453 = vunpack.c.l.b16 %v414
  %v454 = vpack.c.b16 %v439, %v438
  %v455 = vpack.c.b16 %v441, %v440
  %v456 = vpack.c.b16 %v443, %v442
  %v457 = vpack.c.b16 %v445, %v444
  %v458 = vpack.c.b16 %v447, %v446
  %v459 = vpack.c.b16 %v449, %v448
  %v460 = vpack.c.b16 %v451, %v450
  %v461 = vpack.c.b16 %v453, %v452
  %470 = vmatprep.subr.bf16.mxu0 0
  %471 = vmatpush1.bf16.msra.mxu0 %v454
  %472 = vmatprep.subr.bf16.mxu0 0
  %473 = vmatpush1.bf16.msra.mxu0 %v455
  %474 = vmatprep.subr.bf16.mxu0 0
  %475 = vmatpush1.bf16.msra.mxu0 %v456
  %476 = vmatprep.subr.bf16.mxu0 0
  %477 = vmatpush1.bf16.msra.mxu0 %v457
  %478 = vmatprep.subr.bf16.mxu0 0
  %479 = vmatpush1.bf16.msra.mxu0 %v458
  %480 = vmatprep.subr.bf16.mxu0 0
  %481 = vmatpush1.bf16.msra.mxu0 %v459
  %482 = vmatprep.subr.bf16.mxu0 0
  %483 = vmatpush1.bf16.msra.mxu0 %v460
  %484 = vmatprep.subr.bf16.mxu0 0
  %485 = vmatpush1.bf16.msra.mxu0 %v461
  %486 = vmatprep.subr.bf16.mxu0 0
  %487 = vmatpush1.bf16.msra.mxu0 0
  %488 = vmatprep.subr.bf16.mxu0 0
  %489 = vmatpush1.bf16.msra.mxu0 0
  %490 = vmatprep.subr.bf16.mxu0 0
  %491 = vmatpush1.bf16.msra.mxu0 0
  %492 = vmatprep.subr.bf16.mxu0 0
  %493 = vmatpush1.bf16.msra.mxu0 0
  %494 = vmatprep.subr.bf16.mxu0 0
  %495 = vmatpush1.bf16.msra.mxu0 0
  %496 = vmatprep.subr.bf16.mxu0 0
  %497 = vmatpush1.bf16.msra.mxu0 0
  %498 = vmatprep.subr.bf16.mxu0 0
  %499 = vmatpush1.bf16.msra.mxu0 0
  %500 = vmatprep.subr.bf16.mxu0 0
  %501 = vmatpush1.bf16.msra.mxu0 0
  %502 = vmatprep.mubr.bf16.mxu0 0
  %503 = vmatmul.mubr.bf16.gmra.mrb[0].mxu0 %v398
  %v504 = vpop.f32.mrb[0].mxu0
  %v505 = vadd.f32 %v420, %v504
  %v506 = vpop.f32.mrb[0].mxu0
  %v507 = vpop.f32.mrb[0].mxu0
  %v508 = vpop.f32.mrb[0].mxu0
  %509 = vdwg.mxu0
  %v510 = vpack.c.bf16 %v505, %v505
  %v511 = vld [vmem:[%s11] sm:$0xff]
  %v512 = vld [vmem:[%s11 + $0x8] sm:$0xff]
  %v513 = vld [vmem:[%s11 + $0x10] sm:$0xff]
  %v514 = vld [vmem:[%s11 + $0x18] sm:$0xff]
  %v515 = vld [vmem:[%s11 + $0x20] sm:$0xff]
  %v516 = vld [vmem:[%s11 + $0x28] sm:$0xff]
  %v517 = vld [vmem:[%s11 + $0x30] sm:$0xff]
  %v518 = vld [vmem:[%s11 + $0x38] sm:$0xff]
  %v519 = vld [vmem:[%s11 + $0x40] sm:$0xff]
  %v520 = vld [vmem:[%s11 + $0x48] sm:$0xff]
  %v521 = vld [vmem:[%s11 + $0x50] sm:$0xff]
  %v522 = vld [vmem:[%s11 + $0x58] sm:$0xff]
  %v523 = vld [vmem:[%s11 + $0x60] sm:$0xff]
  %v524 = vld [vmem:[%s11 + $0x68] sm:$0xff]
  %v525 = vld [vmem:[%s11 + $0x70] sm:$0xff]
  %v526 = vld [vmem:[%s11 + $0x78] sm:$0xff]
  %v527 = vld [vmem:[%s12] sm:$0x3]
  %v529 = vlaneseq
  %v530 = vshrl.u32 %v529, 7
  %v531 = vsub.s32 0, %v530
  %v532 = vrot.slane %v527, %v531
  %v533 = vlaneseq
  %v534 = vshrl.u32 %v533, 7
  %v535 = vsub.s32 1, %v534
  %v536 = vrot.slane %v527, %v535
  %v555 = vunpack.c.l.b16 %v511
  %v556 = vunpack.c.h.b16 %v511
  %v557 = vunpack.c.l.b16 %v512
  %v558 = vunpack.c.h.b16 %v512
  %v559 = vunpack.c.l.b16 %v513
  %v560 = vunpack.c.h.b16 %v513
  %v561 = vunpack.c.l.b16 %v514
  %v562 = vunpack.c.h.b16 %v514
  %v563 = vunpack.c.l.b16 %v515
  %v564 = vunpack.c.h.b16 %v515
  %v565 = vunpack.c.l.b16 %v516
  %v566 = vunpack.c.h.b16 %v516
  %v567 = vunpack.c.l.b16 %v517
  %v568 = vunpack.c.h.b16 %v517
  %v569 = vunpack.c.l.b16 %v518
  %v570 = vunpack.c.h.b16 %v518
  %v571 = vunpack.c.l.b16 %v519
  %v572 = vunpack.c.h.b16 %v519
  %v573 = vunpack.c.l.b16 %v520
  %v574 = vunpack.c.h.b16 %v520
  %v575 = vunpack.c.l.b16 %v521
  %v576 = vunpack.c.h.b16 %v521
  %v577 = vunpack.c.l.b16 %v522
  %v578 = vunpack.c.h.b16 %v522
  %v579 = vunpack.c.l.b16 %v523
  %v580 = vunpack.c.h.b16 %v523
  %v581 = vunpack.c.l.b16 %v524
  %v582 = vunpack.c.h.b16 %v524
  %v583 = vunpack.c.l.b16 %v525
  %v584 = vunpack.c.h.b16 %v525
  %v585 = vunpack.c.l.b16 %v526
  %v586 = vunpack.c.h.b16 %v526
  %v587 = vpack.c.b16 %v557, %v555
  %v588 = vpack.c.b16 %v558, %v556
  %v589 = vpack.c.b16 %v561, %v559
  %v590 = vpack.c.b16 %v562, %v560
  %v591 = vpack.c.b16 %v565, %v563
  %v592 = vpack.c.b16 %v566, %v564
  %v593 = vpack.c.b16 %v569, %v567
  %v594 = vpack.c.b16 %v570, %v568
  %v595 = vpack.c.b16 %v573, %v571
  %v596 = vpack.c.b16 %v574, %v572
  %v597 = vpack.c.b16 %v577, %v575
  %v598 = vpack.c.b16 %v578, %v576
  %v599 = vpack.c.b16 %v581, %v579
  %v600 = vpack.c.b16 %v582, %v580
  %v601 = vpack.c.b16 %v585, %v583
  %v602 = vpack.c.b16 %v586, %v584
  %619 = vmatprep.subr.bf16.mxu0 %v588
  %620 = vmatpush1.bf16.msra.mxu0 %v587
  %621 = vmatprep.subr.bf16.mxu0 %v590
  %622 = vmatpush1.bf16.msra.mxu0 %v589
  %623 = vmatprep.subr.bf16.mxu0 %v592
  %624 = vmatpush1.bf16.msra.mxu0 %v591
  %625 = vmatprep.subr.bf16.mxu0 %v594
  %626 = vmatpush1.bf16.msra.mxu0 %v593
  %627 = vmatprep.subr.bf16.mxu0 %v596
  %628 = vmatpush1.bf16.msra.mxu0 %v595
  %629 = vmatprep.subr.bf16.mxu0 %v598
  %630 = vmatpush1.bf16.msra.mxu0 %v597
  %631 = vmatprep.subr.bf16.mxu0 %v600
  %632 = vmatpush1.bf16.msra.mxu0 %v599
  %633 = vmatprep.subr.bf16.mxu0 %v602
  %634 = vmatpush1.bf16.msra.mxu0 %v601
  %635 = vmatprep.subr.bf16.mxu0 0
  %636 = vmatpush1.bf16.msra.mxu0 0
  %637 = vmatprep.subr.bf16.mxu0 0
  %638 = vmatpush1.bf16.msra.mxu0 0
  %639 = vmatprep.subr.bf16.mxu0 0
  %640 = vmatpush1.bf16.msra.mxu0 0
  %641 = vmatprep.subr.bf16.mxu0 0
  %642 = vmatpush1.bf16.msra.mxu0 0
  %643 = vmatprep.subr.bf16.mxu0 0
  %644 = vmatpush1.bf16.msra.mxu0 0
  %645 = vmatprep.subr.bf16.mxu0 0
  %646 = vmatpush1.bf16.msra.mxu0 0
  %647 = vmatprep.subr.bf16.mxu0 0
  %648 = vmatpush1.bf16.msra.mxu0 0
  %649 = vmatprep.subr.bf16.mxu0 0
  %650 = vmatpush1.bf16.msra.mxu0 0
  %651 = vmatprep.mubr.bf16.mxu0 0
  %652 = vmatmul.mubr.bf16.gmra.mrb[0].mxu0 %v510
  %v653 = vpop.f32.mrb[0].mxu0
  %v654 = vadd.f32 %v532, %v653
  %v655 = vpop.f32.mrb[0].mxu0
  %v656 = vadd.f32 %v536, %v655
  %v657 = vpop.f32.mrb[0].mxu0
  %v658 = vpop.f32.mrb[0].mxu0
  %659 = vdwg.mxu0
  %v660 = vpack.c.bf16 %v656, %v654
  %v661 = vld [vmem:[%s13] sm:$0xf]
  %v662 = vld [vmem:[%s13 + $0x4] sm:$0xf]
  %v663 = vld [vmem:[%s13 + $0x8] sm:$0xf]
  %v664 = vld [vmem:[%s13 + $0xc] sm:$0xf]
  %v665 = vld [vmem:[%s13 + $0x10] sm:$0xf]
  %v666 = vld [vmem:[%s13 + $0x14] sm:$0xf]
  %v667 = vld [vmem:[%s13 + $0x18] sm:$0xf]
  %v668 = vld [vmem:[%s13 + $0x1c] sm:$0xf]
  %v669 = vld [vmem:[%s13 + $0x20] sm:$0xf]
  %v670 = vld [vmem:[%s13 + $0x24] sm:$0xf]
  %v671 = vld [vmem:[%s13 + $0x28] sm:$0xf]
  %v672 = vld [vmem:[%s13 + $0x2c] sm:$0xf]
  %v673 = vld [vmem:[%s13 + $0x30] sm:$0xf]
  %v674 = vld [vmem:[%s13 + $0x34] sm:$0xf]
  %v675 = vld [vmem:[%s13 + $0x38] sm:$0xf]
  %v676 = vld [vmem:[%s13 + $0x3c] sm:$0xf]
  %v677 = vpack.c.bf16 %v288, %v285
  %v678 = vld [vmem:[%s14] sm:$0xf]
  %v679 = vld [vmem:[%s14 + $0x4] sm:$0xf]
  %v680 = vld [vmem:[%s14 + $0x8] sm:$0xf]
  %v681 = vld [vmem:[%s14 + $0xc] sm:$0xf]
  %v682 = vld [vmem:[%s14 + $0x10] sm:$0xf]
  %v683 = vld [vmem:[%s14 + $0x14] sm:$0xf]
  %v684 = vld [vmem:[%s14 + $0x18] sm:$0xf]
  %v685 = vld [vmem:[%s14 + $0x1c] sm:$0xf]
  %v694 = vunpack.c.l.b16 %v678
  %v695 = vunpack.c.l.b16 %v679
  %v696 = vunpack.c.l.b16 %v680
  %v697 = vunpack.c.l.b16 %v681
  %v698 = vunpack.c.l.b16 %v682
  %v699 = vunpack.c.l.b16 %v683
  %v700 = vunpack.c.l.b16 %v684
  %v701 = vunpack.c.l.b16 %v685
  %v702 = vpack.c.b16 %v695, %v694
  %v703 = vpack.c.b16 %v697, %v696
  %v704 = vpack.c.b16 %v699, %v698
  %v705 = vpack.c.b16 %v701, %v700
  %v711 = vsel %vm168, %v677, 0
  %713 = vmatprep.subr.bf16.mxu0 0
  %714 = vmatpush1.bf16.msra.mxu0 %v702
  %715 = vmatprep.subr.bf16.mxu0 0
  %716 = vmatpush1.bf16.msra.mxu0 %v703
  %717 = vmatprep.subr.bf16.mxu0 0
  %718 = vmatpush1.bf16.msra.mxu0 %v704
  %719 = vmatprep.subr.bf16.mxu0 0
  %720 = vmatpush1.bf16.msra.mxu0 %v705
  %721 = vmatprep.subr.bf16.mxu0 0
  %722 = vmatpush1.bf16.msra.mxu0 0
  %723 = vmatprep.subr.bf16.mxu0 0
  %724 = vmatpush1.bf16.msra.mxu0 0
  %725 = vmatprep.subr.bf16.mxu0 0
  %726 = vmatpush1.bf16.msra.mxu0 0
  %727 = vmatprep.subr.bf16.mxu0 0
  %728 = vmatpush1.bf16.msra.mxu0 0
  %729 = vmatprep.subr.bf16.mxu0 0
  %730 = vmatpush1.bf16.msra.mxu0 0
  %731 = vmatprep.subr.bf16.mxu0 0
  %732 = vmatpush1.bf16.msra.mxu0 0
  %733 = vmatprep.subr.bf16.mxu0 0
  %734 = vmatpush1.bf16.msra.mxu0 0
  %735 = vmatprep.subr.bf16.mxu0 0
  %736 = vmatpush1.bf16.msra.mxu0 0
  %737 = vmatprep.subr.bf16.mxu0 0
  %738 = vmatpush1.bf16.msra.mxu0 0
  %739 = vmatprep.subr.bf16.mxu0 0
  %740 = vmatpush1.bf16.msra.mxu0 0
  %741 = vmatprep.subr.bf16.mxu0 0
  %742 = vmatpush1.bf16.msra.mxu0 0
  %743 = vmatprep.subr.bf16.mxu0 0
  %744 = vmatpush1.bf16.msra.mxu0 0
  %745 = vmatprep.mubr.bf16.mxu0 0
  %746 = vmatmul.mubr.bf16.gmra.mrb[0].mxu0 %v711
  %v747 = vpop.f32.mrb[0].mxu0
  %v748 = vadd.f32 0.0, %v747
  %v749 = vpop.f32.mrb[0].mxu0
  %v750 = vpop.f32.mrb[0].mxu0
  %v751 = vadd.f32 0.0, %v750
  %v752 = vpop.f32.mrb[0].mxu0
  %753 = vdwg.mxu0
  %v770 = vunpack.c.l.b16 %v661
  %v771 = vunpack.c.l.b16 %v662
  %v772 = vunpack.c.l.b16 %v663
  %v773 = vunpack.c.l.b16 %v664
  %v774 = vunpack.c.l.b16 %v665
  %v775 = vunpack.c.l.b16 %v666
  %v776 = vunpack.c.l.b16 %v667
  %v777 = vunpack.c.l.b16 %v668
  %v778 = vunpack.c.l.b16 %v669
  %v779 = vunpack.c.l.b16 %v670
  %v780 = vunpack.c.l.b16 %v671
  %v781 = vunpack.c.l.b16 %v672
  %v782 = vunpack.c.l.b16 %v673
  %v783 = vunpack.c.l.b16 %v674
  %v784 = vunpack.c.l.b16 %v675
  %v785 = vunpack.c.l.b16 %v676
  %v786 = vpack.c.b16 %v771, %v770
  %v787 = vpack.c.b16 %v773, %v772
  %v788 = vpack.c.b16 %v775, %v774
  %v789 = vpack.c.b16 %v777, %v776
  %v790 = vpack.c.b16 %v779, %v778
  %v791 = vpack.c.b16 %v781, %v780
  %v792 = vpack.c.b16 %v783, %v782
  %v793 = vpack.c.b16 %v785, %v784
  %802 = vmatprep.subr.bf16.mxu0 0
  %803 = vmatpush1.bf16.msra.mxu0 %v786
  %804 = vmatprep.subr.bf16.mxu0 0
  %805 = vmatpush1.bf16.msra.mxu0 %v787
  %806 = vmatprep.subr.bf16.mxu0 0
  %807 = vmatpush1.bf16.msra.mxu0 %v788
  %808 = vmatprep.subr.bf16.mxu0 0
  %809 = vmatpush1.bf16.msra.mxu0 %v789
  %810 = vmatprep.subr.bf16.mxu0 0
  %811 = vmatpush1.bf16.msra.mxu0 %v790
  %812 = vmatprep.subr.bf16.mxu0 0
  %813 = vmatpush1.bf16.msra.mxu0 %v791
  %814 = vmatprep.subr.bf16.mxu0 0
  %815 = vmatpush1.bf16.msra.mxu0 %v792
  %816 = vmatprep.subr.bf16.mxu0 0
  %817 = vmatpush1.bf16.msra.mxu0 %v793
  %818 = vmatprep.subr.bf16.mxu0 0
  %819 = vmatpush1.bf16.msra.mxu0 0
  %820 = vmatprep.subr.bf16.mxu0 0
  %821 = vmatpush1.bf16.msra.mxu0 0
  %822 = vmatprep.subr.bf16.mxu0 0
  %823 = vmatpush1.bf16.msra.mxu0 0
  %824 = vmatprep.subr.bf16.mxu0 0
  %825 = vmatpush1.bf16.msra.mxu0 0
  %826 = vmatprep.subr.bf16.mxu0 0
  %827 = vmatpush1.bf16.msra.mxu0 0
  %828 = vmatprep.subr.bf16.mxu0 0
  %829 = vmatpush1.bf16.msra.mxu0 0
  %830 = vmatprep.subr.bf16.mxu0 0
  %831 = vmatpush1.bf16.msra.mxu0 0
  %832 = vmatprep.subr.bf16.mxu0 0
  %833 = vmatpush1.bf16.msra.mxu0 0
  %834 = vmatprep.mubr.bf16.mxu0 0
  %835 = vmatmul.mubr.bf16.gmra.mrb[0].mxu0 %v660
  %v836 = vpop.f32.mrb[0].mxu0
  %v837 = vadd.f32 %v748, %v836
  %v838 = vpop.f32.mrb[0].mxu0
  %v839 = vpop.f32.mrb[0].mxu0
  %v840 = vadd.f32 %v751, %v839
  %v841 = vpop.f32.mrb[0].mxu0
  %842 = vdwg.mxu0
  %v843 = vld [vmem:[%s15] sm:$0x1]
  %v845 = vlaneseq
  %v846 = vshrl.u32 %v845, 7
  %v847 = vsub.s32 0, %v846
  %v848 = vrot.slane %v843, %v847
  %v850 = vadd.f32 %v837, %v848
  %v851 = vadd.f32 %v840, %v848
  %v852 = vmul.f32 %v850, %v850
  %v853 = vmul.f32 %v851, %v851
  %v854 = vsel %vm168, %v852, 0.0
  %855 = vadd.xlane.f32.xlu0 %v854
  %v856 = vpop.xlane.xlu0 %855
  %v857 = vsel %vm168, %v853, 0.0
  %858 = vadd.xlane.f32.xlu0 %v857
  %v859 = vpop.xlane.xlu0 %858
  %v860 = vmul.f32 %v856, %v175
  %v861 = vmul.f32 %v859, %v175
  %v862 = vadd.f32 %v860, 1e-05
  %v863 = vadd.f32 %v861, 1e-05
  %v864 = vrsqrt.pop %v862
  %v865 = vrsqrt.pop %v863
  %v866 = vmul.f32 %v850, %v864
  %v867 = vmul.f32 %v851, %v865
  %v868 = vld [vmem:[%s16] sm:$0x1]
  %v870 = vlaneseq
  %v871 = vshrl.u32 %v870, 7
  %v872 = vsub.s32 0, %v871
  %v873 = vrot.slane %v868, %v872
  %v875 = vmul.f32 %v866, %v873
  %v876 = vmul.f32 %v867, %v873
  %v877 = vxor.u32 %v875, 2147483648
  %v878 = vxor.u32 %v876, 2147483648
  %v879 = vmul.f32 %v877, 1.442695
  %v880 = vpow.pop %v879
  %v881 = vmul.f32 %v878, 1.442695
  %v882 = vpow.pop %v881
  %v883 = vadd.f32 %v880, 1.0
  %v884 = vadd.f32 %v882, 1.0
  %v885 = vrcp.pop %v883
  %v886 = vmul.f32 1.0, %v885
  %v887 = vrcp.pop %v884
  %v888 = vmul.f32 1.0, %v887
  %v889 = vmul.f32 %v875, %v886
  %v890 = vmul.f32 %v876, %v888
  %v891 = vpack.c.bf16 %v890, %v889
  %v892 = vld [vmem:[%s17] sm:$0xf]
  %v893 = vld [vmem:[%s17 + $0x4] sm:$0xf]
  %v894 = vld [vmem:[%s17 + $0x8] sm:$0xf]
  %v895 = vld [vmem:[%s17 + $0xc] sm:$0xf]
  %v896 = vld [vmem:[%s17 + $0x10] sm:$0xf]
  %v897 = vld [vmem:[%s17 + $0x14] sm:$0xf]
  %v898 = vld [vmem:[%s17 + $0x18] sm:$0xf]
  %v899 = vld [vmem:[%s17 + $0x1c] sm:$0xf]
  %v900 = vld [vmem:[%s18] sm:$0x1]
  %v902 = vlaneseq
  %v903 = vshrl.u32 %v902, 7
  %v904 = vsub.s32 0, %v903
  %v905 = vrot.slane %v900, %v904
  %v915 = vunpack.c.l.b16 %v892
  %v916 = vunpack.c.l.b16 %v893
  %v917 = vunpack.c.l.b16 %v894
  %v918 = vunpack.c.l.b16 %v895
  %v919 = vunpack.c.l.b16 %v896
  %v920 = vunpack.c.l.b16 %v897
  %v921 = vunpack.c.l.b16 %v898
  %v922 = vunpack.c.l.b16 %v899
  %v923 = vpack.c.b16 %v916, %v915
  %v924 = vpack.c.b16 %v918, %v917
  %v925 = vpack.c.b16 %v920, %v919
  %v926 = vpack.c.b16 %v922, %v921
  %v932 = vsel %vm168, %v891, 0
  %934 = vmatprep.subr.bf16.mxu0 0
  %935 = vmatpush1.bf16.msra.mxu0 %v923
  %936 = vmatprep.subr.bf16.mxu0 0
  %937 = vmatpush1.bf16.msra.mxu0 %v924
  %938 = vmatprep.subr.bf16.mxu0 0
  %939 = vmatpush1.bf16.msra.mxu0 %v925
  %940 = vmatprep.subr.bf16.mxu0 0
  %941 = vmatpush1.bf16.msra.mxu0 %v926
  %942 = vmatprep.subr.bf16.mxu0 0
  %943 = vmatpush1.bf16.msra.mxu0 0
  %944 = vmatprep.subr.bf16.mxu0 0
  %945 = vmatpush1.bf16.msra.mxu0 0
  %946 = vmatprep.subr.bf16.mxu0 0
  %947 = vmatpush1.bf16.msra.mxu0 0
  %948 = vmatprep.subr.bf16.mxu0 0
  %949 = vmatpush1.bf16.msra.mxu0 0
  %950 = vmatprep.subr.bf16.mxu0 0
  %951 = vmatpush1.bf16.msra.mxu0 0
  %952 = vmatprep.subr.bf16.mxu0 0
  %953 = vmatpush1.bf16.msra.mxu0 0
  %954 = vmatprep.subr.bf16.mxu0 0
  %955 = vmatpush1.bf16.msra.mxu0 0
  %956 = vmatprep.subr.bf16.mxu0 0
  %957 = vmatpush1.bf16.msra.mxu0 0
  %958 = vmatprep.subr.bf16.mxu0 0
  %959 = vmatpush1.bf16.msra.mxu0 0
  %960 = vmatprep.subr.bf16.mxu0 0
  %961 = vmatpush1.bf16.msra.mxu0 0
  %962 = vmatprep.subr.bf16.mxu0 0
  %963 = vmatpush1.bf16.msra.mxu0 0
  %964 = vmatprep.subr.bf16.mxu0 0
  %965 = vmatpush1.bf16.msra.mxu0 0
  %966 = vmatprep.mubr.bf16.mxu0 0
  %967 = vmatmul.mubr.bf16.gmra.mrb[0].mxu0 %v932
  %v968 = vpop.f32.mrb[0].mxu0
  %v969 = vadd.f32 %v905, %v968
  %v970 = vpop.f32.mrb[0].mxu0
  %v971 = vpop.f32.mrb[0].mxu0
  %v972 = vadd.f32 %v905, %v971
  %v973 = vpop.f32.mrb[0].mxu0
  %974 = vdwg.mxu0
  %v975 = vpack.c.bf16 %v972, %v969
  %v976 = vld [vmem:[%s19] sm:$0xf]
  %v977 = vld [vmem:[%s19 + $0x4] sm:$0xf]
  %v978 = vld [vmem:[%s19 + $0x8] sm:$0xf]
  %v979 = vld [vmem:[%s19 + $0xc] sm:$0xf]
  %v980 = vld [vmem:[%s19 + $0x10] sm:$0xf]
  %v981 = vld [vmem:[%s19 + $0x14] sm:$0xf]
  %v982 = vld [vmem:[%s19 + $0x18] sm:$0xf]
  %v983 = vld [vmem:[%s19 + $0x1c] sm:$0xf]
  %v984 = vld [vmem:[%s20] sm:$0x1]
  %v986 = vlaneseq
  %v987 = vshrl.u32 %v986, 7
  %v988 = vsub.s32 0, %v987
  %v989 = vrot.slane %v984, %v988
  %v999 = vunpack.c.l.b16 %v976
  %v1000 = vunpack.c.l.b16 %v977
  %v1001 = vunpack.c.l.b16 %v978
  %v1002 = vunpack.c.l.b16 %v979
  %v1003 = vunpack.c.l.b16 %v980
  %v1004 = vunpack.c.l.b16 %v981
  %v1005 = vunpack.c.l.b16 %v982
  %v1006 = vunpack.c.l.b16 %v983
  %v1007 = vpack.c.b16 %v1000, %v999
  %v1008 = vpack.c.b16 %v1002, %v1001
  %v1009 = vpack.c.b16 %v1004, %v1003
  %v1010 = vpack.c.b16 %v1006, %v1005
  %v1016 = vsel %vm168, %v975, 0
  %1018 = vmatprep.subr.bf16.mxu0 0
  %1019 = vmatpush1.bf16.msra.mxu0 %v1007
  %1020 = vmatprep.subr.bf16.mxu0 0
  %1021 = vmatpush1.bf16.msra.mxu0 %v1008
  %1022 = vmatprep.subr.bf16.mxu0 0
  %1023 = vmatpush1.bf16.msra.mxu0 %v1009
  %1024 = vmatprep.subr.bf16.mxu0 0
  %1025 = vmatpush1.bf16.msra.mxu0 %v1010
  %1026 = vmatprep.subr.bf16.mxu0 0
  %1027 = vmatpush1.bf16.msra.mxu0 0
  %1028 = vmatprep.subr.bf16.mxu0 0
  %1029 = vmatpush1.bf16.msra.mxu0 0
  %1030 = vmatprep.subr.bf16.mxu0 0
  %1031 = vmatpush1.bf16.msra.mxu0 0
  %1032 = vmatprep.subr.bf16.mxu0 0
  %1033 = vmatpush1.bf16.msra.mxu0 0
  %1034 = vmatprep.subr.bf16.mxu0 0
  %1035 = vmatpush1.bf16.msra.mxu0 0
  %1036 = vmatprep.subr.bf16.mxu0 0
  %1037 = vmatpush1.bf16.msra.mxu0 0
  %1038 = vmatprep.subr.bf16.mxu0 0
  %1039 = vmatpush1.bf16.msra.mxu0 0
  %1040 = vmatprep.subr.bf16.mxu0 0
  %1041 = vmatpush1.bf16.msra.mxu0 0
  %1042 = vmatprep.subr.bf16.mxu0 0
  %1043 = vmatpush1.bf16.msra.mxu0 0
  %1044 = vmatprep.subr.bf16.mxu0 0
  %1045 = vmatpush1.bf16.msra.mxu0 0
  %1046 = vmatprep.subr.bf16.mxu0 0
  %1047 = vmatpush1.bf16.msra.mxu0 0
  %1048 = vmatprep.subr.bf16.mxu0 0
  %1049 = vmatpush1.bf16.msra.mxu0 0
  %1050 = vmatprep.mubr.bf16.mxu0 0
  %1051 = vmatmul.mubr.bf16.gmra.mrb[0].mxu0 %v1016
  %v1052 = vpop.f32.mrb[0].mxu0
  %v1053 = vadd.f32 %v989, %v1052
  %v1054 = vpop.f32.mrb[0].mxu0
  %v1055 = vpop.f32.mrb[0].mxu0
  %v1056 = vadd.f32 %v989, %v1055
  %v1057 = vpop.f32.mrb[0].mxu0
  %1058 = vdwg.mxu0
  %1060 = vrot.lane.b32.xlu0 %v1053, 64
  %v1061 = vpop.permute.xlu0 %1060
  %1064 = vrot.lane.b32.xlu0 %v1056, 64
  %v1065 = vpop.permute.xlu0 %1064
  %1067 = vrot.lane.b32.xlu0 %v87, 64
  %v1068 = vpop.permute.xlu0 %1067
  %1070 = vrot.lane.b32.xlu0 %v87, 32
  %v1071 = vpop.permute.xlu0 %1070
  %v1073 = vpack.c.bf16 %v1061, %v1053
  %v1074 = vpack.c.bf16 %v1065, %v1056
  %v1075 = vld [vmem:[%s21] sm:$0xf]
  %v1076 = vld [vmem:[%s21 + $0x4] sm:$0xf]
  %v1077 = vld [vmem:[%s21 + $0x8] sm:$0xf]
  %v1078 = vld [vmem:[%s21 + $0xc] sm:$0xf]
  %v1079 = vld [vmem:[%s21 + $0x10] sm:$0xf]
  %v1080 = vld [vmem:[%s21 + $0x14] sm:$0xf]
  %v1081 = vld [vmem:[%s21 + $0x18] sm:$0xf]
  %v1082 = vld [vmem:[%s21 + $0x1c] sm:$0xf]
  %v1083 = vpack.c.bf16 %v90, %v87
  %v1084 = vpack.c.bf16 %v1071, %v1068
  %v1085 = vld [vmem:[%s22] sm:$0xf]
  %v1086 = vld [vmem:[%s22 + $0x4] sm:$0xf]
  %v1087 = vld [vmem:[%s22 + $0x8] sm:$0xf]
  %v1088 = vld [vmem:[%s22 + $0xc] sm:$0xf]
  %v1093 = vunpack.c.l.b16 %v1085
  %v1094 = vunpack.c.l.b16 %v1086
  %v1095 = vunpack.c.l.b16 %v1087
  %v1096 = vunpack.c.l.b16 %v1088
  %v1097 = vpack.c.b16 %v1094, %v1093
  %v1098 = vpack.c.b16 %v1096, %v1095
  %v1102 = vsel %vm121, %v1083, 0
  %v1105 = vsel %vm121, %v1084, 0
  %1107 = vmatprep.subr.bf16.mxu0 0
  %1108 = vmatpush1.bf16.msra.mxu0 %v1097
  %1109 = vmatprep.subr.bf16.mxu0 0
  %1110 = vmatpush1.bf16.msra.mxu0 %v1098
  %1111 = vmatprep.subr.bf16.mxu0 0
  %1112 = vmatpush1.bf16.msra.mxu0 0
  %1113 = vmatprep.subr.bf16.mxu0 0
  %1114 = vmatpush1.bf16.msra.mxu0 0
  %1115 = vmatprep.subr.bf16.mxu0 0
  %1116 = vmatpush1.bf16.msra.mxu0 0
  %1117 = vmatprep.subr.bf16.mxu0 0
  %1118 = vmatpush1.bf16.msra.mxu0 0
  %1119 = vmatprep.subr.bf16.mxu0 0
  %1120 = vmatpush1.bf16.msra.mxu0 0
  %1121 = vmatprep.subr.bf16.mxu0 0
  %1122 = vmatpush1.bf16.msra.mxu0 0
  %1123 = vmatprep.subr.bf16.mxu0 0
  %1124 = vmatpush1.bf16.msra.mxu0 0
  %1125 = vmatprep.subr.bf16.mxu0 0
  %1126 = vmatpush1.bf16.msra.mxu0 0
  %1127 = vmatprep.subr.bf16.mxu0 0
  %1128 = vmatpush1.bf16.msra.mxu0 0
  %1129 = vmatprep.subr.bf16.mxu0 0
  %1130 = vmatpush1.bf16.msra.mxu0 0
  %1131 = vmatprep.subr.bf16.mxu0 0
  %1132 = vmatpush1.bf16.msra.mxu0 0
  %1133 = vmatprep.subr.bf16.mxu0 0
  %1134 = vmatpush1.bf16.msra.mxu0 0
  %1135 = vmatprep.subr.bf16.mxu0 0
  %1136 = vmatpush1.bf16.msra.mxu0 0
  %1137 = vmatprep.subr.bf16.mxu0 0
  %1138 = vmatpush1.bf16.msra.mxu0 0
  %1139 = vmatprep.mubr.bf16.mxu0 0
  %1140 = vmatmul.mubr.bf16.gmra.mrb[0].mxu0 %v1102
  %v1141 = vpop.f32.mrb[0].mxu0
  %v1142 = vadd.f32 0.0, %v1141
  %v1143 = vpop.f32.mrb[0].mxu0
  %v1144 = vpop.f32.mrb[0].mxu0
  %v1145 = vadd.f32 0.0, %v1144
  %v1146 = vpop.f32.mrb[0].mxu0
  %1147 = vmatprep.mubr.bf16.mxu0 0
  %1148 = vmatmul.mubr.bf16.gmra.mrb[0].mxu0 %v1105
  %v1149 = vpop.f32.mrb[0].mxu0
  %v1150 = vadd.f32 0.0, %v1149
  %v1151 = vpop.f32.mrb[0].mxu0
  %v1152 = vpop.f32.mrb[0].mxu0
  %v1153 = vadd.f32 0.0, %v1152
  %v1154 = vpop.f32.mrb[0].mxu0
  %1155 = vdwg.mxu0
  %v1164 = vunpack.c.l.b16 %v1075
  %v1165 = vunpack.c.l.b16 %v1076
  %v1166 = vunpack.c.l.b16 %v1077
  %v1167 = vunpack.c.l.b16 %v1078
  %v1168 = vunpack.c.l.b16 %v1079
  %v1169 = vunpack.c.l.b16 %v1080
  %v1170 = vunpack.c.l.b16 %v1081
  %v1171 = vunpack.c.l.b16 %v1082
  %v1172 = vpack.c.b16 %v1165, %v1164
  %v1173 = vpack.c.b16 %v1167, %v1166
  %v1174 = vpack.c.b16 %v1169, %v1168
  %v1175 = vpack.c.b16 %v1171, %v1170
  %v1181 = vsel %vm168, %v1073, 0
  %v1184 = vsel %vm168, %v1074, 0
  %1186 = vmatprep.subr.bf16.mxu0 0
  %1187 = vmatpush1.bf16.msra.mxu0 %v1172
  %1188 = vmatprep.subr.bf16.mxu0 0
  %1189 = vmatpush1.bf16.msra.mxu0 %v1173
  %1190 = vmatprep.subr.bf16.mxu0 0
  %1191 = vmatpush1.bf16.msra.mxu0 %v1174
  %1192 = vmatprep.subr.bf16.mxu0 0
  %1193 = vmatpush1.bf16.msra.mxu0 %v1175
  %1194 = vmatprep.subr.bf16.mxu0 0
  %1195 = vmatpush1.bf16.msra.mxu0 0
  %1196 = vmatprep.subr.bf16.mxu0 0
  %1197 = vmatpush1.bf16.msra.mxu0 0
  %1198 = vmatprep.subr.bf16.mxu0 0
  %1199 = vmatpush1.bf16.msra.mxu0 0
  %1200 = vmatprep.subr.bf16.mxu0 0
  %1201 = vmatpush1.bf16.msra.mxu0 0
  %1202 = vmatprep.subr.bf16.mxu0 0
  %1203 = vmatpush1.bf16.msra.mxu0 0
  %1204 = vmatprep.subr.bf16.mxu0 0
  %1205 = vmatpush1.bf16.msra.mxu0 0
  %1206 = vmatprep.subr.bf16.mxu0 0
  %1207 = vmatpush1.bf16.msra.mxu0 0
  %1208 = vmatprep.subr.bf16.mxu0 0
  %1209 = vmatpush1.bf16.msra.mxu0 0
  %1210 = vmatprep.subr.bf16.mxu0 0
  %1211 = vmatpush1.bf16.msra.mxu0 0
  %1212 = vmatprep.subr.bf16.mxu0 0
  %1213 = vmatpush1.bf16.msra.mxu0 0
  %1214 = vmatprep.subr.bf16.mxu0 0
  %1215 = vmatpush1.bf16.msra.mxu0 0
  %1216 = vmatprep.subr.bf16.mxu0 0
  %1217 = vmatpush1.bf16.msra.mxu0 0
  %1218 = vmatprep.mubr.bf16.mxu0 0
  %1219 = vmatmul.mubr.bf16.gmra.mrb[0].mxu0 %v1181
  %v1220 = vpop.f32.mrb[0].mxu0
  %v1221 = vadd.f32 %v1142, %v1220
  %v1222 = vpop.f32.mrb[0].mxu0
  %v1223 = vpop.f32.mrb[0].mxu0
  %v1224 = vadd.f32 %v1145, %v1223
  %v1225 = vpop.f32.mrb[0].mxu0
  %1226 = vmatprep.mubr.bf16.mxu0 0
  %1227 = vmatmul.mubr.bf16.gmra.mrb[0].mxu0 %v1184
  %v1228 = vpop.f32.mrb[0].mxu0
  %v1229 = vadd.f32 %v1150, %v1228
  %v1230 = vpop.f32.mrb[0].mxu0
  %v1231 = vpop.f32.mrb[0].mxu0
  %v1232 = vadd.f32 %v1153, %v1231
  %v1233 = vpop.f32.mrb[0].mxu0
  %1234 = vdwg.mxu0
  %v1235 = vld [vmem:[%s23] sm:$0x1]
  %v1237 = vlaneseq
  %v1238 = vshrl.u32 %v1237, 7
  %v1239 = vsub.s32 0, %v1238
  %v1240 = vrot.slane %v1235, %v1239
  %v1242 = vadd.f32 %v1221, %v1240
  %v1243 = vadd.f32 %v1224, %v1240
  %v1244 = vadd.f32 %v1229, %v1240
  %v1245 = vadd.f32 %v1232, %v1240
  %v1246 = vmul.f32 %v1242, %v1242
  %v1247 = vmul.f32 %v1243, %v1243
  %v1248 = vmul.f32 %v1244, %v1244
  %v1249 = vmul.f32 %v1245, %v1245
  %v1250 = vsel %vm121, %v1246, 0.0
  %1251 = vadd.xlane.f32.xlu0 %v1250
  %v1252 = vpop.xlane.xlu0 %1251
  %v1253 = vsel %vm121, %v1247, 0.0
  %1254 = vadd.xlane.f32.xlu0 %v1253
  %v1255 = vpop.xlane.xlu0 %1254
  %v1256 = vsel %vm121, %v1248, 0.0
  %1257 = vadd.xlane.f32.xlu0 %v1256
  %v1258 = vpop.xlane.xlu0 %1257
  %v1259 = vsel %vm121, %v1249, 0.0
  %1260 = vadd.xlane.f32.xlu0 %v1259
  %v1261 = vpop.xlane.xlu0 %1260
  %v1262 = vrcp.pop 32.0
  %v1263 = vmul.f32 %v1252, %v1262
  %v1264 = vmul.f32 %v1255, %v1262
  %v1265 = vmul.f32 %v1258, %v1262
  %v1266 = vmul.f32 %v1261, %v1262
  %v1267 = vadd.f32 %v1263, 1e-05
  %v1268 = vadd.f32 %v1264, 1e-05
  %v1269 = vadd.f32 %v1265, 1e-05
  %v1270 = vadd.f32 %v1266, 1e-05
  %v1271 = vrsqrt.pop %v1267
  %v1272 = vrsqrt.pop %v1268
  %v1273 = vrsqrt.pop %v1269
  %v1274 = vrsqrt.pop %v1270
  %v1275 = vmul.f32 %v1242, %v1271
  %v1276 = vmul.f32 %v1243, %v1272
  %v1277 = vmul.f32 %v1244, %v1273
  %v1278 = vmul.f32 %v1245, %v1274
  %v1279 = vld [vmem:[%s24] sm:$0x1]
  %v1281 = vlaneseq
  %v1282 = vshrl.u32 %v1281, 7
  %v1283 = vsub.s32 0, %v1282
  %v1284 = vrot.slane %v1279, %v1283
  %v1286 = vmul.f32 %v1275, %v1284
  %v1287 = vmul.f32 %v1276, %v1284
  %v1288 = vmul.f32 %v1277, %v1284
  %v1289 = vmul.f32 %v1278, %v1284
  %v1290 = vxor.u32 %v1286, 2147483648
  %v1291 = vxor.u32 %v1287, 2147483648
  %v1292 = vxor.u32 %v1288, 2147483648
  %v1293 = vxor.u32 %v1289, 2147483648
  %v1294 = vmul.f32 %v1290, 1.442695
  %v1295 = vpow.pop %v1294
  %v1296 = vmul.f32 %v1291, 1.442695
  %v1297 = vpow.pop %v1296
  %v1298 = vmul.f32 %v1292, 1.442695
  %v1299 = vpow.pop %v1298
  %v1300 = vmul.f32 %v1293, 1.442695
  %v1301 = vpow.pop %v1300
  %v1302 = vadd.f32 %v1295, 1.0
  %v1303 = vadd.f32 %v1297, 1.0
  %v1304 = vadd.f32 %v1299, 1.0
  %v1305 = vadd.f32 %v1301, 1.0
  %v1306 = vrcp.pop %v1302
  %v1307 = vmul.f32 1.0, %v1306
  %v1308 = vrcp.pop %v1303
  %v1309 = vmul.f32 1.0, %v1308
  %v1310 = vrcp.pop %v1304
  %v1311 = vmul.f32 1.0, %v1310
  %v1312 = vrcp.pop %v1305
  %v1313 = vmul.f32 1.0, %v1312
  %v1314 = vmul.f32 %v1286, %v1307
  %v1315 = vmul.f32 %v1287, %v1309
  %v1316 = vmul.f32 %v1288, %v1311
  %v1317 = vmul.f32 %v1289, %v1313
  %v1318 = vpack.c.bf16 %v1315, %v1314
  %v1319 = vpack.c.bf16 %v1317, %v1316
  %v1320 = vld [vmem:[%s25] sm:$0xf]
  %v1321 = vld [vmem:[%s25 + $0x4] sm:$0xf]
  %v1322 = vld [vmem:[%s25 + $0x8] sm:$0xf]
  %v1323 = vld [vmem:[%s25 + $0xc] sm:$0xf]
  %v1324 = vld [vmem:[%s26] sm:$0x1]
  %v1326 = vlaneseq
  %v1327 = vshrl.u32 %v1326, 7
  %v1328 = vsub.s32 0, %v1327
  %v1329 = vrot.slane %v1324, %v1328
  %v1335 = vunpack.c.l.b16 %v1320
  %v1336 = vunpack.c.l.b16 %v1321
  %v1337 = vunpack.c.l.b16 %v1322
  %v1338 = vunpack.c.l.b16 %v1323
  %v1339 = vpack.c.b16 %v1336, %v1335
  %v1340 = vpack.c.b16 %v1338, %v1337
  %v1344 = vsel %vm121, %v1318, 0
  %v1347 = vsel %vm121, %v1319, 0
  %1349 = vmatprep.subr.bf16.mxu0 0
  %1350 = vmatpush1.bf16.msra.mxu0 %v1339
  %1351 = vmatprep.subr.bf16.mxu0 0
  %1352 = vmatpush1.bf16.msra.mxu0 %v1340
  %1353 = vmatprep.subr.bf16.mxu0 0
  %1354 = vmatpush1.bf16.msra.mxu0 0
  %1355 = vmatprep.subr.bf16.mxu0 0
  %1356 = vmatpush1.bf16.msra.mxu0 0
  %1357 = vmatprep.subr.bf16.mxu0 0
  %1358 = vmatpush1.bf16.msra.mxu0 0
  %1359 = vmatprep.subr.bf16.mxu0 0
  %1360 = vmatpush1.bf16.msra.mxu0 0
  %1361 = vmatprep.subr.bf16.mxu0 0
  %1362 = vmatpush1.bf16.msra.mxu0 0
  %1363 = vmatprep.subr.bf16.mxu0 0
  %1364 = vmatpush1.bf16.msra.mxu0 0
  %1365 = vmatprep.subr.bf16.mxu0 0
  %1366 = vmatpush1.bf16.msra.mxu0 0
  %1367 = vmatprep.subr.bf16.mxu0 0
  %1368 = vmatpush1.bf16.msra.mxu0 0
  %1369 = vmatprep.subr.bf16.mxu0 0
  %1370 = vmatpush1.bf16.msra.mxu0 0
  %1371 = vmatprep.subr.bf16.mxu0 0
  %1372 = vmatpush1.bf16.msra.mxu0 0
  %1373 = vmatprep.subr.bf16.mxu0 0
  %1374 = vmatpush1.bf16.msra.mxu0 0
  %1375 = vmatprep.subr.bf16.mxu0 0
  %1376 = vmatpush1.bf16.msra.mxu0 0
  %1377 = vmatprep.subr.bf16.mxu0 0
  %1378 = vmatpush1.bf16.msra.mxu0 0
  %1379 = vmatprep.subr.bf16.mxu0 0
  %1380 = vmatpush1.bf16.msra.mxu0 0
  %1381 = vmatprep.mubr.bf16.mxu0 0
  %1382 = vmatmul.mubr.bf16.gmra.mrb[0].mxu0 %v1344
  %v1383 = vpop.f32.mrb[0].mxu0
  %v1384 = vadd.f32 %v1329, %v1383
  %v1385 = vpop.f32.mrb[0].mxu0
  %v1386 = vpop.f32.mrb[0].mxu0
  %v1387 = vadd.f32 %v1329, %v1386
  %v1388 = vpop.f32.mrb[0].mxu0
  %1389 = vmatprep.mubr.bf16.mxu0 0
  %1390 = vmatmul.mubr.bf16.gmra.mrb[0].mxu0 %v1347
  %v1391 = vpop.f32.mrb[0].mxu0
  %v1392 = vadd.f32 %v1329, %v1391
  %v1393 = vpop.f32.mrb[0].mxu0
  %v1394 = vpop.f32.mrb[0].mxu0
  %v1395 = vadd.f32 %v1329, %v1394
  %v1396 = vpop.f32.mrb[0].mxu0
  %1397 = vdwg.mxu0
  %1399 = vrot.lane.b32.xlu0 %v1387, 32
  %v1400 = vpop.permute.xlu0 %1399
  %1403 = vrot.lane.b32.xlu0 %v1392, 64
  %v1404 = vpop.permute.xlu0 %1403
  %1407 = vrot.lane.b32.xlu0 %v1395, 96
  %v1408 = vpop.permute.xlu0 %1407
  %v1410 = vsel %vm121, %v1384, %v1400
  %v1411 = vsel %vm168, %v1410, %v1404
  %vm1412 = vcmask 785408
  %v1413 = vsel %vm1412, %v1411, %v1408
  %1414 = vst [vmem:[%s27] sm:$0xff] %v1413
  // Predicated region
  $region110: #{diff_motion_unet.1} parent=0 // pred_check
    _
  $region111: #{diff_motion_unet.1} parent=0 // pred_check_branch
    %1416 = sbr.rel (0) target = $region113
  $region112: #{diff_motion_unet.1} parent=0 // pred_region
    _
  $region113: #{diff_motion_unet.1} parent=0 // pred_fallthru
    _
  // Predicated region
  $region114: #{diff_motion_unet.1} parent=0 // pred_check
    _
  $region115: #{diff_motion_unet.1} parent=0 // pred_check_branch
    %1418 = sbr.rel (0) target = $region117
  $region116: #{diff_motion_unet.1} parent=0 // pred_region
    _
  $region117: #{diff_motion_unet.1} parent=0 // pred_fallthru
    _

</llo_original>
